<compile_context>
chip_gen: v7x
topology: tpu7x:2x2x1
jax: 0.10.0
libtpu: 0.0.40
codegen_flags: <defaults>
</compile_context>

<pallas_src>
import functools

import jax
import jax.numpy as jnp
from jax.experimental import pallas as pl
from jax.experimental.pallas import tpu as pltpu


# ------------------------------- helpers ----------------------------------- #

def _round_up(v, m):
    return (v + m - 1) // m * m


def _pad_last(x, target):
    extra = target - x.shape[-1]
    if extra <= 0:
        return x
    widths = [(0, 0)] * (x.ndim - 1) + [(0, extra)]
    return jnp.pad(x, widths)


def _pad_second_last(x, target):
    extra = target - x.shape[-2]
    if extra <= 0:
        return x
    widths = [(0, 0)] * (x.ndim - 2) + [(0, extra), (0, 0)]
    return jnp.pad(x, widths)


# ----------------------------- Pallas kernel ------------------------------- #

def fused_mroot_gcn_kernel(a_ref, x_ref, w1_ref, b1_ref, wc_ref, bc_ref,
                           p_ref, lw1_ref, lb1_ref, lw2_ref, lb2_ref,
                           xss_ref, h_ref, y_ref):
    """One grid step == one ensemble branch (grid=(E,), 'parallel').

    a_ref   (1, N, N)       normalized adjacency for this branch
    x_ref   (1, N, F)       node features for this branch
    w1_ref  (1, F, Hp), b1_ref (1, 1, Hp)      conv1 weights (Hp = hidden padded to 128)
    wc_ref  (L-1, Hp, Hp), bc_ref (L-1, 1, Hp) shared conv weights
    p_ref   (1, G, N)       mean-pool matrix
    lw1/lb1/lw2/lb2         head MLP weights (lane-padded)
    xss_ref (1, L, N, Hp)   per-layer activation snapshots (lane-dense)
    h_ref   (1, G, Hp)      pooled graph embeddings (lane-dense)
    y_ref   (1, G, Cp)      logits (lane-dense)
    """
    num_hidden_layers = wc_ref.shape[0]            # num_layers - 1

    a = a_ref[0]                                   # [N, N]
    x = x_ref[0]                                   # [N, F_in]
    w1 = w1_ref[0]                                 # [F_in, Hp]
    b1 = b1_ref[0]                                 # [1, Hp]
    f_in, h_pad = w1.shape

    # conv1: relu(A_hat @ X @ W + b).  Pick the association with the smaller
    # intermediate / fewer MXU flops (mathematically identical to the ref).
    if f_in <= h_pad:
        agg = jnp.dot(a, x, preferred_element_type=jnp.float32)
        z = jnp.dot(agg, w1, preferred_element_type=jnp.float32)
    else:
        xw = jnp.dot(x, w1, preferred_element_type=jnp.float32)
        z = jnp.dot(a, xw, preferred_element_type=jnp.float32)
    x = jnp.maximum(z + b1, 0.0)
    xss_ref[0, 0, :, :] = x                        # full 128-lane store

    # Remaining GCN layers (weights shared across branches).
    for l in range(num_hidden_layers):
        xw = jnp.dot(x, wc_ref[l], preferred_element_type=jnp.float32)
        z = jnp.dot(a, xw, preferred_element_type=jnp.float32) + bc_ref[l]
        x = jnp.maximum(z, 0.0)
        xss_ref[0, l + 1, :, :] = x

    # Head: mean pool (P is the mean-pool matrix), then lin2(relu(lin1(h))).
    h = jnp.dot(p_ref[0], x, preferred_element_type=jnp.float32)      # [G, Hp]
    h_ref[0] = h
    lw1 = lw1_ref[...]
    lb1 = lb1_ref[...]
    lw2 = lw2_ref[...]
    lb2 = lb2_ref[...]
    z1 = jnp.maximum(jnp.dot(h, lw1, preferred_element_type=jnp.float32) + lb1, 0.0)
    # TODO(synk): F.dropout(p=0.5, training=True) between lin1 and lin2 is
    # omitted; this kernel implements the inference path (dropout == id).
    y_ref[0] = jnp.dot(z1, lw2, preferred_element_type=jnp.float32) + lb2


def fused_forward_pallas(a_hat, xs, w1, b1, wc, bc, pool, lw1, lb1, lw2, lb2):
    e, n, _ = a_hat.shape
    f_in = xs.shape[-1]
    hidden = w1.shape[-1]
    num_layers = wc.shape[0] + 1
    g = pool.shape[1]
    c = lw2.shape[-1]

    # Lane-density padding: hidden / classes padded to multiples of 128.
    # Padded weight/bias columns are zero, so padded activation columns stay
    # exactly zero through relu and contribute exact zeros to contractions —
    # valid columns are bit-identical to the unpadded computation.
    h_pad = _round_up(hidden, 128)
    c_pad = _round_up(c, 128)

    w1p = _pad_last(w1, h_pad)                             # (E, F, Hp)
    b1p = _pad_last(b1, h_pad)                             # (E, 1, Hp)
    wcp = _pad_last(_pad_second_last(wc, h_pad), h_pad)    # (L-1, Hp, Hp)
    bcp = _pad_last(bc, h_pad)                             # (L-1, 1, Hp)
    lw1p = _pad_last(_pad_second_last(lw1, h_pad), h_pad)  # (Hp, Hp)
    lb1p = _pad_last(lb1, h_pad)                           # (1, Hp)
    lw2p = _pad_last(_pad_second_last(lw2, h_pad), c_pad)  # (Hp, Cp)
    lb2p = _pad_last(lb2, c_pad)                           # (1, Cp)

    # Advisory cost estimate for the fused custom call.
    flops_conv1 = 2 * n * f_in * h_pad + 2 * n * n * (f_in if f_in <= h_pad else h_pad)
    flops_convs = (num_layers - 1) * (2 * n * h_pad * h_pad + 2 * n * n * h_pad)
    flops_head = 2 * g * n * h_pad + 2 * g * h_pad * h_pad + 2 * g * h_pad * c_pad
    flops = int(e * (flops_conv1 + flops_convs + flops_head))
    bytes_accessed = int(4 * (
        a_hat.size + xs.size + w1p.size + b1p.size + wcp.size + bcp.size
        + pool.size + lw1p.size + lb1p.size + lw2p.size + lb2p.size
        + e * num_layers * n * h_pad + e * g * h_pad + e * g * c_pad))

    grid_spec = pltpu.PrefetchScalarGridSpec(
        num_scalar_prefetch=0,
        grid=(e,),
        in_specs=[
            pl.BlockSpec((1, n, n), lambda i: (i, 0, 0)),                       # a_hat
            pl.BlockSpec((1, n, f_in), lambda i: (i, 0, 0)),                    # xs
            pl.BlockSpec((1, f_in, h_pad), lambda i: (i, 0, 0)),                # w1
            pl.BlockSpec((1, 1, h_pad), lambda i: (i, 0, 0)),                   # b1
            pl.BlockSpec((num_layers - 1, h_pad, h_pad), lambda i: (0, 0, 0)),  # wc (shared)
            pl.BlockSpec((num_layers - 1, 1, h_pad), lambda i: (0, 0, 0)),      # bc (shared)
            pl.BlockSpec((1, g, n), lambda i: (i, 0, 0)),                       # pool
            pl.BlockSpec((h_pad, h_pad), lambda i: (0, 0)),                     # lw1 (shared)
            pl.BlockSpec((1, h_pad), lambda i: (0, 0)),                         # lb1
            pl.BlockSpec((h_pad, c_pad), lambda i: (0, 0)),                     # lw2
            pl.BlockSpec((1, c_pad), lambda i: (0, 0)),                         # lb2
        ],
        out_specs=(
            pl.BlockSpec((1, num_layers, n, h_pad), lambda i: (i, 0, 0, 0)),    # xss
            pl.BlockSpec((1, g, h_pad), lambda i: (i, 0, 0)),                   # h
            pl.BlockSpec((1, g, c_pad), lambda i: (i, 0, 0)),                   # y
        ),
    )

    xss_p, h_p, y_p = pl.pallas_call(
        fused_mroot_gcn_kernel,
        out_shape=(
            jax.ShapeDtypeStruct((e, num_layers, n, h_pad), jnp.float32),
            jax.ShapeDtypeStruct((e, g, h_pad), jnp.float32),
            jax.ShapeDtypeStruct((e, g, c_pad), jnp.float32),
        ),
        grid_spec=grid_spec,
        compiler_params=pltpu.CompilerParams(
            dimension_semantics=("parallel",),       # E branches across TCs on v7x
            vmem_limit_bytes=32 * 1024 * 1024),
        cost_estimate=pl.CostEstimate(
            flops=flops, transcendentals=0, bytes_accessed=bytes_accessed),
    )(a_hat, xs, w1p, b1p, wcp, bcp, pool, lw1p, lb1p, lw2p, lb2p)

    # Slice the lane padding back off (cheap, inside the same jit).
    return xss_p[..., :hidden], h_p[..., :hidden], y_p[..., :c]


# ------------------------------- JAX glue ---------------------------------- #

def gcn_norm_dense(edge_index, num_nodes, edge_weight):
    """Dense A_hat = D^-1/2 (A + I) D^-1/2 matching PyG gcn_norm semantics.

    edge_index[0] = source (row), edge_index[1] = target (col); messages flow
    source -> target, so A_hat[target, source] holds the normalized weight.
    """
    row = edge_index[0]
    col = edge_index[1]
    ew = edge_weight.astype(jnp.float32)
    loop = jnp.arange(num_nodes, dtype=row.dtype)
    row = jnp.concatenate([row, loop])
    col = jnp.concatenate([col, loop])
    ew = jnp.concatenate([ew, jnp.ones(num_nodes, dtype=jnp.float32)])
    deg = jnp.zeros(num_nodes, dtype=jnp.float32).at[col].add(ew)
    dinv = jnp.where(deg > 0, deg ** -0.5, 0.0)
    norm = dinv[row] * ew * dinv[col]
    a_hat = jnp.zeros((num_nodes, num_nodes), jnp.float32).at[col, row].add(norm)
    return a_hat


def mean_pool_matrix(batch, num_graphs):
    onehot = (batch[None, :] == jnp.arange(num_graphs)[:, None]).astype(jnp.float32)
    counts = jnp.maximum(onehot.sum(axis=1, keepdims=True), 1.0)
    return onehot / counts


@functools.partial(jax.jit, static_argnames=("num_graphs",))
def _mroot_gcn_forward_jit(params, xs, edge_indices, edge_weights, batches,
                           num_graphs):
    num_ensemble, num_nodes, _ = xs.shape
    # NOTE: if A_hat / pool are static per dataset, precompute them once
    # outside this jit; the scatter-adds dominate at toy shapes.
    a_hat = jnp.stack([
        gcn_norm_dense(edge_indices[i], num_nodes, edge_weights[i])
        for i in range(num_ensemble)
    ])
    pool = jnp.stack([
        mean_pool_matrix(batches[i], num_graphs) for i in range(num_ensemble)
    ])
    w1 = jnp.stack([w for (w, _) in params["conv1"]])
    b1 = jnp.stack([b for (_, b) in params["conv1"]])
    wc = jnp.stack([w for (w, _) in params["convs"]])
    bc = jnp.stack([b for (_, b) in params["convs"]])
    lw1, lb1 = params["lin1"]
    lw2, lb2 = params["lin2"]
    return fused_forward_pallas(a_hat, xs, w1, b1, wc, bc, pool, lw1, lb1, lw2, lb2)


def mroot_gcn_forward(params, datas):
    """Reproduces mrootGCN.forward: returns ([edge_index_list, xss, hs], ys).

    Assumes all branches share the same per-branch shapes (num_nodes,
    num_edges, num_graphs), as in the example below, so both ensemble
    branches are batched into one fused kernel launch.
    """
    edge_index_list = [d["edge_index"] for d in datas]
    num_graphs = int(datas[0]["num_graphs"])
    xs = jnp.stack([d["x"] for d in datas])
    eis = jnp.stack([d["edge_index"] for d in datas])
    ews = jnp.stack([
        d["edge_weights"].astype(jnp.float32) if "edge_weights" in d
        else jnp.ones((d["edge_index"].shape[1],), jnp.float32)
        for d in datas
    ])
    batches = jnp.stack([d["batch"] for d in datas])

    xss_arr, hs_arr, ys_arr = _mroot_gcn_forward_jit(
        params, xs, eis, ews, batches, num_graphs)

    num_ensemble, num_layers = xss_arr.shape[0], xss_arr.shape[1]
    xss = [[xss_arr[i, l] for l in range(num_layers)] for i in range(num_ensemble)]
    hs = [hs_arr[i] for i in range(num_ensemble)]
    ys = [ys_arr[i] for i in range(num_ensemble)]
    return ([edge_index_list, xss, hs], ys)


# --------------------------- pure-JAX reference ----------------------------- #

def _reference_forward(params, datas):
    hs, ys = [], []
    hp = jax.lax.Precision.HIGHEST
    for i, d in enumerate(datas):
        n = d["x"].shape[0]
        ew = d.get("edge_weights", jnp.ones((d["edge_index"].shape[1],), jnp.float32))
        a = gcn_norm_dense(d["edge_index"], n, ew)
        w, b = params["conv1"][i]
        x = jnp.maximum(a @ (d["x"] @ w) + b, 0.0)
        for (wc, bc) in params["convs"]:
            x = jnp.maximum(jnp.dot(a, jnp.dot(x, wc, precision=hp), precision=hp) + bc, 0.0)
        p = mean_pool_matrix(d["batch"], d["num_graphs"])
        h = jnp.dot(p, x, precision=hp)
        z = jnp.maximum(jnp.dot(h, params["lin1"][0], precision=hp) + params["lin1"][1], 0.0)
        y = jnp.dot(z, params["lin2"][0], precision=hp) + params["lin2"][1]
        hs.append(h)
        ys.append(y)
    return hs, ys


# --------------------------------- params ----------------------------------- #

def _glorot(key, shape):
    lim = (6.0 / (shape[0] + shape[1])) ** 0.5
    return jax.random.uniform(key, shape, jnp.float32, -lim, lim)


def init_params(key, in_dim, num_classes, num_layers, hidden, num_ensemble):
    n_keys = num_ensemble + (num_layers - 1) + 2
    keys = jax.random.split(key, n_keys)
    k = 0
    params = {"conv1": [], "convs": []}
    for _ in range(num_ensemble):
        params["conv1"].append((_glorot(keys[k], (in_dim, hidden)),
                                jnp.zeros((1, hidden), jnp.float32)))
        k += 1
    for _ in range(num_layers - 1):
        params["convs"].append((_glorot(keys[k], (hidden, hidden)),
                                jnp.zeros((1, hidden), jnp.float32)))
        k += 1
    params["lin1"] = (_glorot(keys[k], (hidden, hidden)),
                      jnp.zeros((1, hidden), jnp.float32))
    k += 1
    params["lin2"] = (_glorot(keys[k], (hidden, num_classes)),
                      jnp.zeros((1, num_classes), jnp.float32))
    return params


# ---------------------------------- main ------------------------------------ #

if __name__ == "__main__":
    key = jax.random.PRNGKey(0)
    kp, kd = jax.random.split(key)

    # Module config (small): in_dim=8, hidden=32, num_classes=4, num_layers=3,
    # num_ensemble=2, pool_type='mean', use_jk=False.
    in_dim, hidden, num_classes, num_layers, num_ensemble = 8, 32, 4, 3, 2
    params = init_params(kp, in_dim, num_classes, num_layers, hidden, num_ensemble)

    # Two "Data" objects (one per ensemble branch): 16 nodes, 40 edges, 2 graphs.
    num_nodes, num_edges, num_graphs = 16, 40, 2
    datas = []
    dkeys = jax.random.split(kd, 3 * num_ensemble)
    for i in range(num_ensemble):
        kx, ke, kw = dkeys[3 * i], dkeys[3 * i + 1], dkeys[3 * i + 2]
        x = jax.random.normal(kx, (num_nodes, in_dim), jnp.float32)
        edge_index = jax.random.randint(ke, (2, num_edges), 0, num_nodes, jnp.int32)
        batch = jnp.concatenate(
            [jnp.zeros(num_nodes // 2, jnp.int32), jnp.ones(num_nodes // 2, jnp.int32)]
        )
        d = {"x": x, "edge_index": edge_index, "batch": batch,
             "num_graphs": num_graphs}
        if i == 0:  # exercise the 'edge_weights' branch of forward()
            d["edge_weights"] = jax.random.uniform(kw, (num_edges,), jnp.float32, 0.5, 1.5)
        datas.append(d)

    (aux, ys) = mroot_gcn_forward(params, datas)
    edge_index_list, xss, hs = aux

    for y in ys:
        jax.block_until_ready(y)
    for h in hs:
        jax.block_until_ready(h)
    for branch in xss:
        for t in branch:
            jax.block_until_ready(t)

    # Shape checks (match mrootGCN.forward outputs).
    assert ys[0].shape == (num_graphs, num_classes)
    assert hs[0].shape == (num_graphs, hidden)
    assert len(xss) == num_ensemble and len(xss[0]) == num_layers
    assert xss[0][0].shape == (num_nodes, hidden)

    # Numerical check against a pure-JAX reference.
    hs_ref, ys_ref = _reference_forward(params, datas)
    for i in range(num_ensemble):
        assert jnp.allclose(hs[i], hs_ref[i], rtol=1e-3, atol=1e-3)
        assert jnp.allclose(ys[i], ys_ref[i], rtol=1e-3, atol=1e-3)

    print("KERNEL_OK")
</pallas_src>

<mosaic_0001>
module attributes {stable_mosaic.version = 11 : i64} {
  func.func @fused_mroot_gcn_kernel(%arg0: i32, %arg1: memref<1x16x16xf32, #tpu.memory_space<vmem>>, %arg2: memref<1x16x8xf32, #tpu.memory_space<vmem>>, %arg3: memref<1x8x128xf32, #tpu.memory_space<vmem>>, %arg4: memref<1x1x128xf32, #tpu.memory_space<vmem>>, %arg5: memref<2x128x128xf32, #tpu.memory_space<vmem>>, %arg6: memref<2x1x128xf32, #tpu.memory_space<vmem>>, %arg7: memref<1x2x16xf32, #tpu.memory_space<vmem>>, %arg8: memref<128x128xf32, #tpu.memory_space<vmem>>, %arg9: memref<1x128xf32, #tpu.memory_space<vmem>>, %arg10: memref<128x128xf32, #tpu.memory_space<vmem>>, %arg11: memref<1x128xf32, #tpu.memory_space<vmem>>, %arg12: memref<1x3x16x128xf32, #tpu.memory_space<vmem>>, %arg13: memref<1x2x128xf32, #tpu.memory_space<vmem>>, %arg14: memref<1x2x128xf32, #tpu.memory_space<vmem>>) attributes {dimension_semantics = [#tpu.dimension_semantics<parallel>], iteration_bounds = array<i64: 2>, scalar_prefetch = 0 : i64, scratch_operands = 0 : i64, tpu.core_type = #tpu.core_type<tc>, window_params = [{transform_indices = @transform_0, window_bounds = array<i64: 1, 16, 16>}, {transform_indices = @transform_1, window_bounds = array<i64: 1, 16, 8>}, {transform_indices = @transform_2, window_bounds = array<i64: 1, 8, 128>}, {transform_indices = @transform_3, window_bounds = array<i64: 1, 1, 128>}, {pipeline_mode = #tpu.pipeline_mode<synchronous>, transform_indices = @transform_4, window_bounds = array<i64: 2, 128, 128>}, {pipeline_mode = #tpu.pipeline_mode<synchronous>, transform_indices = @transform_5, window_bounds = array<i64: 2, 1, 128>}, {transform_indices = @transform_6, window_bounds = array<i64: 1, 2, 16>}, {pipeline_mode = #tpu.pipeline_mode<synchronous>, transform_indices = @transform_7, window_bounds = array<i64: 128, 128>}, {pipeline_mode = #tpu.pipeline_mode<synchronous>, transform_indices = @transform_8, window_bounds = array<i64: 1, 128>}, {pipeline_mode = #tpu.pipeline_mode<synchronous>, transform_indices = @transform_9, window_bounds = array<i64: 128, 128>}, {pipeline_mode = #tpu.pipeline_mode<synchronous>, transform_indices = @transform_10, window_bounds = array<i64: 1, 128>}, {transform_indices = @transform_11, window_bounds = array<i64: 1, 3, 16, 128>}, {transform_indices = @transform_12, window_bounds = array<i64: 1, 2, 128>}, {transform_indices = @transform_13, window_bounds = array<i64: 1, 2, 128>}]} {
    %c0 = arith.constant 0 : index
    %c0_0 = arith.constant 0 : index
    %c0_1 = arith.constant 0 : index
    %0 = vector.load %arg1[%c0, %c0_0, %c0_1] : memref<1x16x16xf32, #tpu.memory_space<vmem>>, vector<1x16x16xf32>
    %1 = vector.shape_cast %0 : vector<1x16x16xf32> to vector<16x16xf32>
    %c0_2 = arith.constant 0 : index
    %c0_3 = arith.constant 0 : index
    %c0_4 = arith.constant 0 : index
    %2 = vector.load %arg2[%c0_2, %c0_3, %c0_4] : memref<1x16x8xf32, #tpu.memory_space<vmem>>, vector<1x16x8xf32>
    %3 = vector.shape_cast %2 : vector<1x16x8xf32> to vector<16x8xf32>
    %c0_5 = arith.constant 0 : index
    %c0_6 = arith.constant 0 : index
    %c0_7 = arith.constant 0 : index
    %4 = vector.load %arg3[%c0_5, %c0_6, %c0_7] : memref<1x8x128xf32, #tpu.memory_space<vmem>>, vector<1x8x128xf32>
    %5 = vector.shape_cast %4 : vector<1x8x128xf32> to vector<8x128xf32>
    %c0_8 = arith.constant 0 : index
    %c0_9 = arith.constant 0 : index
    %c0_10 = arith.constant 0 : index
    %6 = vector.load %arg4[%c0_8, %c0_9, %c0_10] : memref<1x1x128xf32, #tpu.memory_space<vmem>>, vector<1x1x128xf32>
    %7 = vector.shape_cast %6 : vector<1x1x128xf32> to vector<1x128xf32>
    %cst = arith.constant dense<0.000000e+00> : vector<16x8xf32>
    %8 = tpu.matmul %1, %3, %cst {dimension_numbers = #tpu.dot_dimension_numbers<[1], [0], [0], [1], [0, 0, 1, 1], [], []>} : vector<16x16xf32>, vector<16x8xf32>, vector<16x8xf32> -> vector<16x8xf32>
    %cst_11 = arith.constant dense<0.000000e+00> : vector<16x128xf32>
    %9 = tpu.matmul %8, %5, %cst_11 {dimension_numbers = #tpu.dot_dimension_numbers<[1], [0], [0], [1], [0, 0, 1, 1], [], []>} : vector<16x8xf32>, vector<8x128xf32>, vector<16x128xf32> -> vector<16x128xf32>
    %10 = vector.broadcast %7 : vector<1x128xf32> to vector<16x128xf32>
    %11 = arith.addf %9, %10 : vector<16x128xf32>
    %cst_12 = arith.constant 0.000000e+00 : f32
    %12 = vector.broadcast %cst_12 : f32 to vector<16x128xf32>
    %13 = arith.maximumf %11, %12 : vector<16x128xf32>
    %c0_13 = arith.constant 0 : index
    %c0_14 = arith.constant 0 : index
    %c0_15 = arith.constant 0 : index
    %c0_16 = arith.constant 0 : index
    %14 = vector.load %arg12[%c0_13, %c0_14, %c0_15, %c0_16] : memref<1x3x16x128xf32, #tpu.memory_space<vmem>>, vector<1x1x16x128xf32>
    %15 = vector.shape_cast %14 : vector<1x1x16x128xf32> to vector<16x128xf32>
    %16 = vector.shape_cast %13 : vector<16x128xf32> to vector<1x1x16x128xf32>
    tpu.vector_store %arg12[%c0_13, %c0_14, %c0_15, %c0_16], %16 {strides = array<i32>} : memref<1x3x16x128xf32, #tpu.memory_space<vmem>>, vector<1x1x16x128xf32>,
    %c0_17 = arith.constant 0 : index
    %c0_18 = arith.constant 0 : index
    %c0_19 = arith.constant 0 : index
    %17 = vector.load %arg5[%c0_17, %c0_18, %c0_19] : memref<2x128x128xf32, #tpu.memory_space<vmem>>, vector<1x128x128xf32>
    %18 = vector.shape_cast %17 : vector<1x128x128xf32> to vector<128x128xf32>
    %cst_20 = arith.constant dense<0.000000e+00> : vector<16x128xf32>
    %19 = tpu.matmul %13, %18, %cst_20 {dimension_numbers = #tpu.dot_dimension_numbers<[1], [0], [0], [1], [0, 0, 1, 1], [], []>} : vector<16x128xf32>, vector<128x128xf32>, vector<16x128xf32> -> vector<16x128xf32>
    %cst_21 = arith.constant dense<0.000000e+00> : vector<16x128xf32>
    %20 = tpu.matmul %1, %19, %cst_21 {dimension_numbers = #tpu.dot_dimension_numbers<[1], [0], [0], [1], [0, 0, 1, 1], [], []>} : vector<16x16xf32>, vector<16x128xf32>, vector<16x128xf32> -> vector<16x128xf32>
    %c0_22 = arith.constant 0 : index
    %c0_23 = arith.constant 0 : index
    %c0_24 = arith.constant 0 : index
    %21 = vector.load %arg6[%c0_22, %c0_23, %c0_24] : memref<2x1x128xf32, #tpu.memory_space<vmem>>, vector<1x1x128xf32>
    %22 = vector.shape_cast %21 : vector<1x1x128xf32> to vector<1x128xf32>
    %23 = vector.broadcast %22 : vector<1x128xf32> to vector<16x128xf32>
    %24 = arith.addf %20, %23 : vector<16x128xf32>
    %cst_25 = arith.constant 0.000000e+00 : f32
    %25 = vector.broadcast %cst_25 : f32 to vector<16x128xf32>
    %26 = arith.maximumf %24, %25 : vector<16x128xf32>
    %c0_26 = arith.constant 0 : index
    %c1 = arith.constant 1 : index
    %c0_27 = arith.constant 0 : index
    %c0_28 = arith.constant 0 : index
    %27 = vector.load %arg12[%c0_26, %c1, %c0_27, %c0_28] : memref<1x3x16x128xf32, #tpu.memory_space<vmem>>, vector<1x1x16x128xf32>
    %28 = vector.shape_cast %27 : vector<1x1x16x128xf32> to vector<16x128xf32>
    %29 = vector.shape_cast %26 : vector<16x128xf32> to vector<1x1x16x128xf32>
    tpu.vector_store %arg12[%c0_26, %c1, %c0_27, %c0_28], %29 {strides = array<i32>} : memref<1x3x16x128xf32, #tpu.memory_space<vmem>>, vector<1x1x16x128xf32>,
    %c1_29 = arith.constant 1 : index
    %c0_30 = arith.constant 0 : index
    %c0_31 = arith.constant 0 : index
    %30 = vector.load %arg5[%c1_29, %c0_30, %c0_31] : memref<2x128x128xf32, #tpu.memory_space<vmem>>, vector<1x128x128xf32>
    %31 = vector.shape_cast %30 : vector<1x128x128xf32> to vector<128x128xf32>
    %cst_32 = arith.constant dense<0.000000e+00> : vector<16x128xf32>
    %32 = tpu.matmul %26, %31, %cst_32 {dimension_numbers = #tpu.dot_dimension_numbers<[1], [0], [0], [1], [0, 0, 1, 1], [], []>} : vector<16x128xf32>, vector<128x128xf32>, vector<16x128xf32> -> vector<16x128xf32>
    %cst_33 = arith.constant dense<0.000000e+00> : vector<16x128xf32>
    %33 = tpu.matmul %1, %32, %cst_33 {dimension_numbers = #tpu.dot_dimension_numbers<[1], [0], [0], [1], [0, 0, 1, 1], [], []>} : vector<16x16xf32>, vector<16x128xf32>, vector<16x128xf32> -> vector<16x128xf32>
    %c1_34 = arith.constant 1 : index
    %c0_35 = arith.constant 0 : index
    %c0_36 = arith.constant 0 : index
    %34 = vector.load %arg6[%c1_34, %c0_35, %c0_36] : memref<2x1x128xf32, #tpu.memory_space<vmem>>, vector<1x1x128xf32>
    %35 = vector.shape_cast %34 : vector<1x1x128xf32> to vector<1x128xf32>
    %36 = vector.broadcast %35 : vector<1x128xf32> to vector<16x128xf32>
    %37 = arith.addf %33, %36 : vector<16x128xf32>
    %cst_37 = arith.constant 0.000000e+00 : f32
    %38 = vector.broadcast %cst_37 : f32 to vector<16x128xf32>
    %39 = arith.maximumf %37, %38 : vector<16x128xf32>
    %c0_38 = arith.constant 0 : index
    %c2 = arith.constant 2 : index
    %c0_39 = arith.constant 0 : index
    %c0_40 = arith.constant 0 : index
    %40 = vector.load %arg12[%c0_38, %c2, %c0_39, %c0_40] : memref<1x3x16x128xf32, #tpu.memory_space<vmem>>, vector<1x1x16x128xf32>
    %41 = vector.shape_cast %40 : vector<1x1x16x128xf32> to vector<16x128xf32>
    %42 = vector.shape_cast %39 : vector<16x128xf32> to vector<1x1x16x128xf32>
    tpu.vector_store %arg12[%c0_38, %c2, %c0_39, %c0_40], %42 {strides = array<i32>} : memref<1x3x16x128xf32, #tpu.memory_space<vmem>>, vector<1x1x16x128xf32>,
    %c0_41 = arith.constant 0 : index
    %c0_42 = arith.constant 0 : index
    %c0_43 = arith.constant 0 : index
    %43 = vector.load %arg7[%c0_41, %c0_42, %c0_43] : memref<1x2x16xf32, #tpu.memory_space<vmem>>, vector<1x2x16xf32>
    %44 = vector.shape_cast %43 : vector<1x2x16xf32> to vector<2x16xf32>
    %cst_44 = arith.constant dense<0.000000e+00> : vector<2x128xf32>
    %45 = tpu.matmul %44, %39, %cst_44 {dimension_numbers = #tpu.dot_dimension_numbers<[1], [0], [0], [1], [0, 0, 1, 1], [], []>} : vector<2x16xf32>, vector<16x128xf32>, vector<2x128xf32> -> vector<2x128xf32>
    %c0_45 = arith.constant 0 : index
    %c0_46 = arith.constant 0 : index
    %c0_47 = arith.constant 0 : index
    %46 = vector.load %arg13[%c0_45, %c0_46, %c0_47] : memref<1x2x128xf32, #tpu.memory_space<vmem>>, vector<1x2x128xf32>
    %47 = vector.shape_cast %46 : vector<1x2x128xf32> to vector<2x128xf32>
    %48 = vector.shape_cast %45 : vector<2x128xf32> to vector<1x2x128xf32>
    tpu.vector_store %arg13[%c0_45, %c0_46, %c0_47], %48 {strides = array<i32>} : memref<1x2x128xf32, #tpu.memory_space<vmem>>, vector<1x2x128xf32>,
    %c0_48 = arith.constant 0 : index
    %c0_49 = arith.constant 0 : index
    %49 = vector.load %arg8[%c0_48, %c0_49] : memref<128x128xf32, #tpu.memory_space<vmem>>, vector<128x128xf32>
    %c0_50 = arith.constant 0 : index
    %c0_51 = arith.constant 0 : index
    %50 = vector.load %arg9[%c0_50, %c0_51] : memref<1x128xf32, #tpu.memory_space<vmem>>, vector<1x128xf32>
    %c0_52 = arith.constant 0 : index
    %c0_53 = arith.constant 0 : index
    %51 = vector.load %arg10[%c0_52, %c0_53] : memref<128x128xf32, #tpu.memory_space<vmem>>, vector<128x128xf32>
    %c0_54 = arith.constant 0 : index
    %c0_55 = arith.constant 0 : index
    %52 = vector.load %arg11[%c0_54, %c0_55] : memref<1x128xf32, #tpu.memory_space<vmem>>, vector<1x128xf32>
    %cst_56 = arith.constant dense<0.000000e+00> : vector<2x128xf32>
    %53 = tpu.matmul %45, %49, %cst_56 {dimension_numbers = #tpu.dot_dimension_numbers<[1], [0], [0], [1], [0, 0, 1, 1], [], []>} : vector<2x128xf32>, vector<128x128xf32>, vector<2x128xf32> -> vector<2x128xf32>
    %54 = vector.broadcast %50 : vector<1x128xf32> to vector<2x128xf32>
    %55 = arith.addf %53, %54 : vector<2x128xf32>
    %cst_57 = arith.constant 0.000000e+00 : f32
    %56 = vector.broadcast %cst_57 : f32 to vector<2x128xf32>
    %57 = arith.maximumf %55, %56 : vector<2x128xf32>
    %cst_58 = arith.constant dense<0.000000e+00> : vector<2x128xf32>
    %58 = tpu.matmul %57, %51, %cst_58 {dimension_numbers = #tpu.dot_dimension_numbers<[1], [0], [0], [1], [0, 0, 1, 1], [], []>} : vector<2x128xf32>, vector<128x128xf32>, vector<2x128xf32> -> vector<2x128xf32>
    %59 = vector.broadcast %52 : vector<1x128xf32> to vector<2x128xf32>
    %60 = arith.addf %58, %59 : vector<2x128xf32>
    %c0_59 = arith.constant 0 : index
    %c0_60 = arith.constant 0 : index
    %c0_61 = arith.constant 0 : index
    %61 = vector.load %arg14[%c0_59, %c0_60, %c0_61] : memref<1x2x128xf32, #tpu.memory_space<vmem>>, vector<1x2x128xf32>
    %62 = vector.shape_cast %61 : vector<1x2x128xf32> to vector<2x128xf32>
    %63 = vector.shape_cast %60 : vector<2x128xf32> to vector<1x2x128xf32>
    tpu.vector_store %arg14[%c0_59, %c0_60, %c0_61], %63 {strides = array<i32>} : memref<1x2x128xf32, #tpu.memory_space<vmem>>, vector<1x2x128xf32>,
    return
  }
  func.func @transform_0(%arg0: i32) -> (i32, i32, i32) {
    %c0_i32 = arith.constant 0 : i32
    %c0_i32_0 = arith.constant 0 : i32
    %c0_i32_1 = arith.constant 0 : i32
    return %arg0, %c0_i32, %c0_i32_0 : i32, i32, i32
  }
  func.func @transform_1(%arg0: i32) -> (i32, i32, i32) {
    %c0_i32 = arith.constant 0 : i32
    %c0_i32_0 = arith.constant 0 : i32
    %c0_i32_1 = arith.constant 0 : i32
    return %arg0, %c0_i32, %c0_i32_0 : i32, i32, i32
  }
  func.func @transform_2(%arg0: i32) -> (i32, i32, i32) {
    %c0_i32 = arith.constant 0 : i32
    %c0_i32_0 = arith.constant 0 : i32
    %c0_i32_1 = arith.constant 0 : i32
    return %arg0, %c0_i32, %c0_i32_0 : i32, i32, i32
  }
  func.func @transform_3(%arg0: i32) -> (i32, i32, i32) {
    %c0_i32 = arith.constant 0 : i32
    %c0_i32_0 = arith.constant 0 : i32
    %c0_i32_1 = arith.constant 0 : i32
    return %arg0, %c0_i32, %c0_i32_0 : i32, i32, i32
  }
  func.func @transform_4(%arg0: i32) -> (i32, i32, i32) {
    %c0_i32 = arith.constant 0 : i32
    %c0_i32_0 = arith.constant 0 : i32
    %c0_i32_1 = arith.constant 0 : i32
    %c0_i32_2 = arith.constant 0 : i32
    return %c0_i32, %c0_i32_0, %c0_i32_1 : i32, i32, i32
  }
  func.func @transform_5(%arg0: i32) -> (i32, i32, i32) {
    %c0_i32 = arith.constant 0 : i32
    %c0_i32_0 = arith.constant 0 : i32
    %c0_i32_1 = arith.constant 0 : i32
    %c0_i32_2 = arith.constant 0 : i32
    return %c0_i32, %c0_i32_0, %c0_i32_1 : i32, i32, i32
  }
  func.func @transform_6(%arg0: i32) -> (i32, i32, i32) {
    %c0_i32 = arith.constant 0 : i32
    %c0_i32_0 = arith.constant 0 : i32
    %c0_i32_1 = arith.constant 0 : i32
    return %arg0, %c0_i32, %c0_i32_0 : i32, i32, i32
  }
  func.func @transform_7(%arg0: i32) -> (i32, i32) {
    %c0_i32 = arith.constant 0 : i32
    %c0_i32_0 = arith.constant 0 : i32
    %c0_i32_1 = arith.constant 0 : i32
    return %c0_i32, %c0_i32_0 : i32, i32
  }
  func.func @transform_8(%arg0: i32) -> (i32, i32) {
    %c0_i32 = arith.constant 0 : i32
    %c0_i32_0 = arith.constant 0 : i32
    %c0_i32_1 = arith.constant 0 : i32
    return %c0_i32, %c0_i32_0 : i32, i32
  }
  func.func @transform_9(%arg0: i32) -> (i32, i32) {
    %c0_i32 = arith.constant 0 : i32
    %c0_i32_0 = arith.constant 0 : i32
    %c0_i32_1 = arith.constant 0 : i32
    return %c0_i32, %c0_i32_0 : i32, i32
  }
  func.func @transform_10(%arg0: i32) -> (i32, i32) {
    %c0_i32 = arith.constant 0 : i32
    %c0_i32_0 = arith.constant 0 : i32
    %c0_i32_1 = arith.constant 0 : i32
    return %c0_i32, %c0_i32_0 : i32, i32
  }
  func.func @transform_11(%arg0: i32) -> (i32, i32, i32, i32) {
    %c0_i32 = arith.constant 0 : i32
    %c0_i32_0 = arith.constant 0 : i32
    %c0_i32_1 = arith.constant 0 : i32
    %c0_i32_2 = arith.constant 0 : i32
    return %arg0, %c0_i32, %c0_i32_0, %c0_i32_1 : i32, i32, i32, i32
  }
  func.func @transform_12(%arg0: i32) -> (i32, i32, i32) {
    %c0_i32 = arith.constant 0 : i32
    %c0_i32_0 = arith.constant 0 : i32
    %c0_i32_1 = arith.constant 0 : i32
    return %arg0, %c0_i32, %c0_i32_0 : i32, i32, i32
  }
  func.func @transform_13(%arg0: i32) -> (i32, i32, i32) {
    %c0_i32 = arith.constant 0 : i32
    %c0_i32_0 = arith.constant 0 : i32
    %c0_i32_1 = arith.constant 0 : i32
    return %arg0, %c0_i32, %c0_i32_0 : i32, i32, i32
  }
}

</mosaic_0001>

<llo_original>
// kernel: _mroot_gcn_forward_jit.1
$region0: #{_mroot_gcn_forward_jit.1}
  #allocation0 [shape = 'u32[]', space=smem, size = 0x4, offset = 0x4, fixed_abs, tag = 'smem constant byte address 0x4 - core index']
  #allocation1 [shape = 'u32[144,128]{1,0:T(1,128)}', space=vmem, size = 0x12000, scoped, tag = 'internal scratch']
  %s0 = inlined_call_operand.vmem [shape: f32[2,16,16], index: 0, kind: input, shape index: {}]
  %s1 = inlined_call_operand.vmem [shape: f32[2,16,8], index: 1, kind: input, shape index: {}]
  %s2 = inlined_call_operand.vmem [shape: f32[2,8,128], index: 2, kind: input, shape index: {}]
  %s3 = inlined_call_operand.vmem [shape: f32[2,1,128], index: 3, kind: input, shape index: {}]
  %s4 = inlined_call_operand.vmem [shape: f32[2,128,128], index: 4, kind: input, shape index: {}]
  %s5 = inlined_call_operand.vmem [shape: f32[2,1,128], index: 5, kind: input, shape index: {}]
  %s6 = inlined_call_operand.vmem [shape: f32[2,2,16], index: 6, kind: input, shape index: {}]
  %s7 = inlined_call_operand.vmem [shape: f32[128,128], index: 7, kind: input, shape index: {}]
  %s8 = inlined_call_operand.vmem [shape: f32[1,128], index: 8, kind: input, shape index: {}]
  %s9 = inlined_call_operand.vmem [shape: f32[128,128], index: 9, kind: input, shape index: {}]
  %s10 = inlined_call_operand.vmem [shape: f32[1,128], index: 10, kind: input, shape index: {}]
  %s11 = inlined_call_operand.hbm [shape: f32[2,3,16,128], index: 11, kind: output, shape index: {0}]
  %s12 = inlined_call_operand.hbm [shape: f32[2,2,128], index: 12, kind: output, shape index: {1}]
  %s13 = inlined_call_operand.hbm [shape: f32[2,2,128], index: 13, kind: output, shape index: {2}]
  %14 = xla_tuple %s11, %s12, %s13
  %s15 = sld [smem:[#allocation0]]
  $region93: #{_mroot_gcn_forward_jit.1} parent=0
    _
  %s17 = ssub.s32 1, %s15
  %s18 = scalar_select 0, %s17, %s15
  $region1: #{_mroot_gcn_forward_jit.1} parent=0
    #allocation2 [shape = 'u8[49152]{0}', space=vmem, size = 0xc000, scoped, tag = 'output window, operand 0']
    #allocation3 [shape = 's32[2]{0}', space=sflag, size = 0x8, scoped, tag = 'scoped memory for _mroot_gcn_forward_jit.1']
    #allocation4 [shape = 'u8[2048]{0}', space=vmem, size = 0x800, scoped, tag = 'output window, operand 1']
    #allocation5 [shape = 's32[2]{0}', space=sflag, size = 0x8, scoped, tag = 'scoped memory for _mroot_gcn_forward_jit.1']
    #allocation6 [shape = 'u8[2048]{0}', space=vmem, size = 0x800, scoped, tag = 'output window, operand 2']
    %19 = vsyncpa [#allocation3], 0
    %s20 = scalar_lea.sflag [#allocation3], 1
    %21 = vsyncpa %s20, 0
    %22 = vsyncpa [#allocation5], 0
    %s23 = scalar_lea.sflag [#allocation5], 1
    %24 = vsyncpa %s23, 0
    loop: start=0, step=1, limit=4
    $region2: #{_mroot_gcn_forward_jit.1} parent=1 // loop_pre_header
      _
    $region3: #{_mroot_gcn_forward_jit.1} parent=1 // loop_header
      %s26 = sphi 0, %s30
      %p27 = scmp.ge.s32.totalorder %s26, 4
      %s36 = sphi 0, %s38
      %s39 = sphi 0, %s36
      %s40 = sphi 0, %s39
      %s56 = sphi 0, %s40
      %s62 = sphi 0, %s64
      %s65 = sphi 0, %s62
      %s66 = sphi 0, %s65
      %s82 = sphi 0, %s66
      %s88 = sphi 0, %s90
      %s91 = sphi 0, %s88
      %s92 = sphi 0, %s91
      %s108 = sphi 0, %s92
      %s114 = sphi 0, %s116
      %s117 = sphi 0, %s114
      %s118 = sphi 0, %s117
      %s134 = sphi 0, %s118
      %s138 = sphi 0, %s138
      %s140 = sphi 0, %s138
      %s141 = sphi 0, %s140
      %s155 = sphi 0, %s141
      %s159 = sphi 0, %s159
      %s161 = sphi 0, %s159
      %s162 = sphi 0, %s161
      %s176 = sphi 0, %s162
      %s182 = sphi 0, %s184
      %s185 = sphi 0, %s182
      %s186 = sphi 0, %s185
      %s202 = sphi 0, %s186
      %s206 = sphi 0, %s206
      %s208 = sphi 0, %s206
      %s209 = sphi 0, %s208
      %s223 = sphi 0, %s209
      %s227 = sphi 0, %s227
      %s229 = sphi 0, %s227
      %s230 = sphi 0, %s229
      %s244 = sphi 0, %s230
      %s248 = sphi 0, %s248
      %s250 = sphi 0, %s248
      %s251 = sphi 0, %s250
      %s265 = sphi 0, %s251
      %s269 = sphi 0, %s269
      %s271 = sphi 0, %s269
      %s272 = sphi 0, %s271
      %s286 = sphi 0, %s272
      %s292 = sphi 0, %s294
      %s295 = sphi 0, %s292
      %s296 = sphi 0, %s295
      %s312 = sphi 0, %s296
      %s318 = sphi 0, %s320
      %s321 = sphi 0, %s318
      %s322 = sphi 0, %s321
      %s338 = sphi 0, %s322
      %s344 = sphi 0, %s346
      %s347 = sphi 0, %s344
      %s348 = sphi 0, %s347
      %s364 = sphi 0, %s348
    $region4: #{_mroot_gcn_forward_jit.1} parent=1 // loop_header_branch
      %29 = sbr.rel (%p27) target = $region8
    $region5: #{_mroot_gcn_forward_jit.1} parent=1 // loop_body
      %s31 = ssub.s32 %s26, 1
      %s32 = ssub.s32 %s26, 2
      %s33 = sadd.s32 %s26, 1
      %s34 = ssub.s32 %s26, %s33
      %p35 = scmp.eq.s32.totalorder %s34, 0
      %s37 = sadd.s32 %s36, 1
      %s38 = scalar_select %p35, %s36, %s37
      %p41 = pneg %p35
      %p42 = scmp.eq.s32.totalorder %s26, 1
      %p43 = por %p41, %p42
      %p44 = scmp.ne.s32.totalorder %s36, %s39
      %p45 = scmp.eq.s32.totalorder %s26, 0
      %p46 = por %p44, %p45
      %p47 = scmp.ne.s32.totalorder %s36, %s39
      %p48 = scmp.eq.s32.totalorder %s31, 1
      %p49 = por %p47, %p48
      %p50 = scmp.ne.s32.totalorder %s39, %s40
      %p51 = scmp.eq.s32.totalorder %s31, 0
      %p52 = por %p50, %p51
      %p53 = scmp.ne.s32.totalorder %s39, %s40
      %p54 = scmp.eq.s32.totalorder %s32, 1
      %p55 = por %p53, %p54
      %p57 = scmp.ne.s32.totalorder %s40, %s56
      %p58 = scmp.eq.s32.totalorder %s32, 0
      %p59 = por %p57, %p58
      %s60 = ssub.s32 %s26, %s33
      %p61 = scmp.eq.s32.totalorder %s60, 0
      %s63 = sadd.s32 %s62, 1
      %s64 = scalar_select %p61, %s62, %s63
      %p67 = pneg %p61
      %p68 = scmp.eq.s32.totalorder %s26, 1
      %p69 = por %p67, %p68
      %p70 = scmp.ne.s32.totalorder %s62, %s65
      %p71 = scmp.eq.s32.totalorder %s26, 0
      %p72 = por %p70, %p71
      %p73 = scmp.ne.s32.totalorder %s62, %s65
      %p74 = scmp.eq.s32.totalorder %s31, 1
      %p75 = por %p73, %p74
      %p76 = scmp.ne.s32.totalorder %s65, %s66
      %p77 = scmp.eq.s32.totalorder %s31, 0
      %p78 = por %p76, %p77
      %p79 = scmp.ne.s32.totalorder %s65, %s66
      %p80 = scmp.eq.s32.totalorder %s32, 1
      %p81 = por %p79, %p80
      %p83 = scmp.ne.s32.totalorder %s66, %s82
      %p84 = scmp.eq.s32.totalorder %s32, 0
      %p85 = por %p83, %p84
      %s86 = ssub.s32 %s26, %s33
      %p87 = scmp.eq.s32.totalorder %s86, 0
      %s89 = sadd.s32 %s88, 1
      %s90 = scalar_select %p87, %s88, %s89
      %p93 = pneg %p87
      %p94 = scmp.eq.s32.totalorder %s26, 1
      %p95 = por %p93, %p94
      %p96 = scmp.ne.s32.totalorder %s88, %s91
      %p97 = scmp.eq.s32.totalorder %s26, 0
      %p98 = por %p96, %p97
      %p99 = scmp.ne.s32.totalorder %s88, %s91
      %p100 = scmp.eq.s32.totalorder %s31, 1
      %p101 = por %p99, %p100
      %p102 = scmp.ne.s32.totalorder %s91, %s92
      %p103 = scmp.eq.s32.totalorder %s31, 0
      %p104 = por %p102, %p103
      %p105 = scmp.ne.s32.totalorder %s91, %s92
      %p106 = scmp.eq.s32.totalorder %s32, 1
      %p107 = por %p105, %p106
      %p109 = scmp.ne.s32.totalorder %s92, %s108
      %p110 = scmp.eq.s32.totalorder %s32, 0
      %p111 = por %p109, %p110
      %s112 = ssub.s32 %s26, %s33
      %p113 = scmp.eq.s32.totalorder %s112, 0
      %s115 = sadd.s32 %s114, 1
      %s116 = scalar_select %p113, %s114, %s115
      %p119 = pneg %p113
      %p120 = scmp.eq.s32.totalorder %s26, 1
      %p121 = por %p119, %p120
      %p122 = scmp.ne.s32.totalorder %s114, %s117
      %p123 = scmp.eq.s32.totalorder %s26, 0
      %p124 = por %p122, %p123
      %p125 = scmp.ne.s32.totalorder %s114, %s117
      %p126 = scmp.eq.s32.totalorder %s31, 1
      %p127 = por %p125, %p126
      %p128 = scmp.ne.s32.totalorder %s117, %s118
      %p129 = scmp.eq.s32.totalorder %s31, 0
      %p130 = por %p128, %p129
      %p131 = scmp.ne.s32.totalorder %s117, %s118
      %p132 = scmp.eq.s32.totalorder %s32, 1
      %p133 = por %p131, %p132
      %p135 = scmp.ne.s32.totalorder %s118, %s134
      %p136 = scmp.eq.s32.totalorder %s32, 0
      %p137 = por %p135, %p136
      %s139 = sadd.s32 %s138, 1
      %p142 = scmp.eq.s32.totalorder %s26, 1
      %p143 = scmp.ne.s32.totalorder %s138, %s140
      %p144 = scmp.eq.s32.totalorder %s26, 0
      %p145 = por %p143, %p144
      %p146 = scmp.ne.s32.totalorder %s138, %s140
      %p147 = scmp.eq.s32.totalorder %s31, 1
      %p148 = por %p146, %p147
      %p149 = scmp.ne.s32.totalorder %s140, %s141
      %p150 = scmp.eq.s32.totalorder %s31, 0
      %p151 = por %p149, %p150
      %p152 = scmp.ne.s32.totalorder %s140, %s141
      %p153 = scmp.eq.s32.totalorder %s32, 1
      %p154 = por %p152, %p153
      %p156 = scmp.ne.s32.totalorder %s141, %s155
      %p157 = scmp.eq.s32.totalorder %s32, 0
      %p158 = por %p156, %p157
      %s160 = sadd.s32 %s159, 1
      %p163 = scmp.eq.s32.totalorder %s26, 1
      %p164 = scmp.ne.s32.totalorder %s159, %s161
      %p165 = scmp.eq.s32.totalorder %s26, 0
      %p166 = por %p164, %p165
      %p167 = scmp.ne.s32.totalorder %s159, %s161
      %p168 = scmp.eq.s32.totalorder %s31, 1
      %p169 = por %p167, %p168
      %p170 = scmp.ne.s32.totalorder %s161, %s162
      %p171 = scmp.eq.s32.totalorder %s31, 0
      %p172 = por %p170, %p171
      %p173 = scmp.ne.s32.totalorder %s161, %s162
      %p174 = scmp.eq.s32.totalorder %s32, 1
      %p175 = por %p173, %p174
      %p177 = scmp.ne.s32.totalorder %s162, %s176
      %p178 = scmp.eq.s32.totalorder %s32, 0
      %p179 = por %p177, %p178
      %s180 = ssub.s32 %s26, %s33
      %p181 = scmp.eq.s32.totalorder %s180, 0
      %s183 = sadd.s32 %s182, 1
      %s184 = scalar_select %p181, %s182, %s183
      %p187 = pneg %p181
      %p188 = scmp.eq.s32.totalorder %s26, 1
      %p189 = por %p187, %p188
      %p190 = scmp.ne.s32.totalorder %s182, %s185
      %p191 = scmp.eq.s32.totalorder %s26, 0
      %p192 = por %p190, %p191
      %p193 = scmp.ne.s32.totalorder %s182, %s185
      %p194 = scmp.eq.s32.totalorder %s31, 1
      %p195 = por %p193, %p194
      %p196 = scmp.ne.s32.totalorder %s185, %s186
      %p197 = scmp.eq.s32.totalorder %s31, 0
      %p198 = por %p196, %p197
      %p199 = scmp.ne.s32.totalorder %s185, %s186
      %p200 = scmp.eq.s32.totalorder %s32, 1
      %p201 = por %p199, %p200
      %p203 = scmp.ne.s32.totalorder %s186, %s202
      %p204 = scmp.eq.s32.totalorder %s32, 0
      %p205 = por %p203, %p204
      %s207 = sadd.s32 %s206, 1
      %p210 = scmp.eq.s32.totalorder %s26, 1
      %p211 = scmp.ne.s32.totalorder %s206, %s208
      %p212 = scmp.eq.s32.totalorder %s26, 0
      %p213 = por %p211, %p212
      %p214 = scmp.ne.s32.totalorder %s206, %s208
      %p215 = scmp.eq.s32.totalorder %s31, 1
      %p216 = por %p214, %p215
      %p217 = scmp.ne.s32.totalorder %s208, %s209
      %p218 = scmp.eq.s32.totalorder %s31, 0
      %p219 = por %p217, %p218
      %p220 = scmp.ne.s32.totalorder %s208, %s209
      %p221 = scmp.eq.s32.totalorder %s32, 1
      %p222 = por %p220, %p221
      %p224 = scmp.ne.s32.totalorder %s209, %s223
      %p225 = scmp.eq.s32.totalorder %s32, 0
      %p226 = por %p224, %p225
      %s228 = sadd.s32 %s227, 1
      %p231 = scmp.eq.s32.totalorder %s26, 1
      %p232 = scmp.ne.s32.totalorder %s227, %s229
      %p233 = scmp.eq.s32.totalorder %s26, 0
      %p234 = por %p232, %p233
      %p235 = scmp.ne.s32.totalorder %s227, %s229
      %p236 = scmp.eq.s32.totalorder %s31, 1
      %p237 = por %p235, %p236
      %p238 = scmp.ne.s32.totalorder %s229, %s230
      %p239 = scmp.eq.s32.totalorder %s31, 0
      %p240 = por %p238, %p239
      %p241 = scmp.ne.s32.totalorder %s229, %s230
      %p242 = scmp.eq.s32.totalorder %s32, 1
      %p243 = por %p241, %p242
      %p245 = scmp.ne.s32.totalorder %s230, %s244
      %p246 = scmp.eq.s32.totalorder %s32, 0
      %p247 = por %p245, %p246
      %s249 = sadd.s32 %s248, 1
      %p252 = scmp.eq.s32.totalorder %s26, 1
      %p253 = scmp.ne.s32.totalorder %s248, %s250
      %p254 = scmp.eq.s32.totalorder %s26, 0
      %p255 = por %p253, %p254
      %p256 = scmp.ne.s32.totalorder %s248, %s250
      %p257 = scmp.eq.s32.totalorder %s31, 1
      %p258 = por %p256, %p257
      %p259 = scmp.ne.s32.totalorder %s250, %s251
      %p260 = scmp.eq.s32.totalorder %s31, 0
      %p261 = por %p259, %p260
      %p262 = scmp.ne.s32.totalorder %s250, %s251
      %p263 = scmp.eq.s32.totalorder %s32, 1
      %p264 = por %p262, %p263
      %p266 = scmp.ne.s32.totalorder %s251, %s265
      %p267 = scmp.eq.s32.totalorder %s32, 0
      %p268 = por %p266, %p267
      %s270 = sadd.s32 %s269, 1
      %p273 = scmp.eq.s32.totalorder %s26, 1
      %p274 = scmp.ne.s32.totalorder %s269, %s271
      %p275 = scmp.eq.s32.totalorder %s26, 0
      %p276 = por %p274, %p275
      %p277 = scmp.ne.s32.totalorder %s269, %s271
      %p278 = scmp.eq.s32.totalorder %s31, 1
      %p279 = por %p277, %p278
      %p280 = scmp.ne.s32.totalorder %s271, %s272
      %p281 = scmp.eq.s32.totalorder %s31, 0
      %p282 = por %p280, %p281
      %p283 = scmp.ne.s32.totalorder %s271, %s272
      %p284 = scmp.eq.s32.totalorder %s32, 1
      %p285 = por %p283, %p284
      %p287 = scmp.ne.s32.totalorder %s272, %s286
      %p288 = scmp.eq.s32.totalorder %s32, 0
      %p289 = por %p287, %p288
      %s290 = ssub.s32 %s26, %s33
      %p291 = scmp.eq.s32.totalorder %s290, 0
      %s293 = sadd.s32 %s292, 1
      %s294 = scalar_select %p291, %s292, %s293
      %p297 = pneg %p291
      %p298 = scmp.eq.s32.totalorder %s26, 1
      %p299 = por %p297, %p298
      %p300 = scmp.ne.s32.totalorder %s292, %s295
      %p301 = scmp.eq.s32.totalorder %s26, 0
      %p302 = por %p300, %p301
      %p303 = scmp.ne.s32.totalorder %s292, %s295
      %p304 = scmp.eq.s32.totalorder %s31, 1
      %p305 = por %p303, %p304
      %p306 = scmp.ne.s32.totalorder %s295, %s296
      %p307 = scmp.eq.s32.totalorder %s31, 0
      %p308 = por %p306, %p307
      %p309 = scmp.ne.s32.totalorder %s295, %s296
      %p310 = scmp.eq.s32.totalorder %s32, 1
      %p311 = por %p309, %p310
      %p313 = scmp.ne.s32.totalorder %s296, %s312
      %p314 = scmp.eq.s32.totalorder %s32, 0
      %p315 = por %p313, %p314
      %s316 = ssub.s32 %s26, %s33
      %p317 = scmp.eq.s32.totalorder %s316, 0
      %s319 = sadd.s32 %s318, 1
      %s320 = scalar_select %p317, %s318, %s319
      %p323 = pneg %p317
      %p324 = scmp.eq.s32.totalorder %s26, 1
      %p325 = por %p323, %p324
      %p326 = scmp.ne.s32.totalorder %s318, %s321
      %p327 = scmp.eq.s32.totalorder %s26, 0
      %p328 = por %p326, %p327
      %p329 = scmp.ne.s32.totalorder %s318, %s321
      %p330 = scmp.eq.s32.totalorder %s31, 1
      %p331 = por %p329, %p330
      %p332 = scmp.ne.s32.totalorder %s321, %s322
      %p333 = scmp.eq.s32.totalorder %s31, 0
      %p334 = por %p332, %p333
      %p335 = scmp.ne.s32.totalorder %s321, %s322
      %p336 = scmp.eq.s32.totalorder %s32, 1
      %p337 = por %p335, %p336
      %p339 = scmp.ne.s32.totalorder %s322, %s338
      %p340 = scmp.eq.s32.totalorder %s32, 0
      %p341 = por %p339, %p340
      %s342 = ssub.s32 %s26, %s33
      %p343 = scmp.eq.s32.totalorder %s342, 0
      %s345 = sadd.s32 %s344, 1
      %s346 = scalar_select %p343, %s344, %s345
      %p349 = pneg %p343
      %p350 = scmp.eq.s32.totalorder %s26, 1
      %p351 = por %p349, %p350
      %p352 = scmp.ne.s32.totalorder %s344, %s347
      %p353 = scmp.eq.s32.totalorder %s26, 0
      %p354 = por %p352, %p353
      %p355 = scmp.ne.s32.totalorder %s344, %s347
      %p356 = scmp.eq.s32.totalorder %s31, 1
      %p357 = por %p355, %p356
      %p358 = scmp.ne.s32.totalorder %s347, %s348
      %p359 = scmp.eq.s32.totalorder %s31, 0
      %p360 = por %p358, %p359
      %p361 = scmp.ne.s32.totalorder %s347, %s348
      %p362 = scmp.eq.s32.totalorder %s32, 1
      %p363 = por %p361, %p362
      %p365 = scmp.ne.s32.totalorder %s348, %s364
      %p366 = scmp.eq.s32.totalorder %s32, 0
      %p367 = por %p365, %p366
      %p368 = scmp.le.s32.totalorder 1, %s26
      %p369 = scmp.lt.s32.totalorder %s26, 3
      %p370 = pnand %p368, %p369
      %p371 = pneg %p370
      // Predicated region
      $region9: #{_mroot_gcn_forward_jit.1} parent=5 // pred_check
        _
      $region10: #{_mroot_gcn_forward_jit.1} parent=5 // pred_check_branch
        %373 = sbr.rel (%p370) target = $region12
      $region11: #{_mroot_gcn_forward_jit.1} parent=5 // pred_region
        %s374 = ssub.s32 %s26, 1
        // Predicated region
        $region13: #{_mroot_gcn_forward_jit.1} parent=11 // pred_check
          %p375 = pneg %p151
        $region14: #{_mroot_gcn_forward_jit.1} parent=11 // pred_check_branch
          %377 = sbr.rel (%p375) target = $region16
        $region15: #{_mroot_gcn_forward_jit.1} parent=11 // pred_region
          _
        $region16: #{_mroot_gcn_forward_jit.1} parent=11 // pred_fallthru
          _
        // Predicated region
        $region17: #{_mroot_gcn_forward_jit.1} parent=11 // pred_check
          %p378 = pneg %p172
        $region18: #{_mroot_gcn_forward_jit.1} parent=11 // pred_check_branch
          %380 = sbr.rel (%p378) target = $region20
        $region19: #{_mroot_gcn_forward_jit.1} parent=11 // pred_region
          _
        $region20: #{_mroot_gcn_forward_jit.1} parent=11 // pred_fallthru
          _
        // Predicated region
        $region21: #{_mroot_gcn_forward_jit.1} parent=11 // pred_check
          %p381 = pneg %p219
        $region22: #{_mroot_gcn_forward_jit.1} parent=11 // pred_check_branch
          %383 = sbr.rel (%p381) target = $region24
        $region23: #{_mroot_gcn_forward_jit.1} parent=11 // pred_region
          _
        $region24: #{_mroot_gcn_forward_jit.1} parent=11 // pred_fallthru
          _
        // Predicated region
        $region25: #{_mroot_gcn_forward_jit.1} parent=11 // pred_check
          %p384 = pneg %p240
        $region26: #{_mroot_gcn_forward_jit.1} parent=11 // pred_check_branch
          %386 = sbr.rel (%p384) target = $region28
        $region27: #{_mroot_gcn_forward_jit.1} parent=11 // pred_region
          _
        $region28: #{_mroot_gcn_forward_jit.1} parent=11 // pred_fallthru
          _
        // Predicated region
        $region29: #{_mroot_gcn_forward_jit.1} parent=11 // pred_check
          %p387 = pneg %p261
        $region30: #{_mroot_gcn_forward_jit.1} parent=11 // pred_check_branch
          %389 = sbr.rel (%p387) target = $region32
        $region31: #{_mroot_gcn_forward_jit.1} parent=11 // pred_region
          _
        $region32: #{_mroot_gcn_forward_jit.1} parent=11 // pred_fallthru
          _
        // Predicated region
        $region33: #{_mroot_gcn_forward_jit.1} parent=11 // pred_check
          %p390 = pneg %p282
        $region34: #{_mroot_gcn_forward_jit.1} parent=11 // pred_check_branch
          %392 = sbr.rel (%p390) target = $region36
        $region35: #{_mroot_gcn_forward_jit.1} parent=11 // pred_region
          _
        $region36: #{_mroot_gcn_forward_jit.1} parent=11 // pred_fallthru
          _
      $region12: #{_mroot_gcn_forward_jit.1} parent=5 // pred_fallthru
        _
      %p393 = scmp.lt.s32.totalorder %s26, 2
      // Predicated region
      $region37: #{_mroot_gcn_forward_jit.1} parent=5 // pred_check
        %p394 = pneg %p393
      $region38: #{_mroot_gcn_forward_jit.1} parent=5 // pred_check_branch
        %396 = sbr.rel (%p394) target = $region40
      $region39: #{_mroot_gcn_forward_jit.1} parent=5 // pred_region
        // Predicated region
        $region41: #{_mroot_gcn_forward_jit.1} parent=39 // pred_check
          %p397 = pneg %p46
        $region42: #{_mroot_gcn_forward_jit.1} parent=39 // pred_check_branch
          %399 = sbr.rel (%p397) target = $region44
        $region43: #{_mroot_gcn_forward_jit.1} parent=39 // pred_region
          %p400 = scmp.lt.s32.totalorder %s26, 1
          %s401 = scalar_select %p400, %s26, 1
          %s402 = smul.addr %s401, 2
          %s403 = smul.addr %s402, 8
          %s404 = scalar_lea.vmem %s0, %s403
        $region44: #{_mroot_gcn_forward_jit.1} parent=39 // pred_fallthru
          _
        // Predicated region
        $region45: #{_mroot_gcn_forward_jit.1} parent=39 // pred_check
          %p405 = pneg %p72
        $region46: #{_mroot_gcn_forward_jit.1} parent=39 // pred_check_branch
          %407 = sbr.rel (%p405) target = $region48
        $region47: #{_mroot_gcn_forward_jit.1} parent=39 // pred_region
          %p408 = scmp.lt.s32.totalorder %s26, 1
          %s409 = scalar_select %p408, %s26, 1
          %s410 = smul.addr %s409, 2
          %s411 = smul.addr %s410, 8
          %s412 = scalar_lea.vmem %s1, %s411
        $region48: #{_mroot_gcn_forward_jit.1} parent=39 // pred_fallthru
          _
        // Predicated region
        $region49: #{_mroot_gcn_forward_jit.1} parent=39 // pred_check
          %p413 = pneg %p98
        $region50: #{_mroot_gcn_forward_jit.1} parent=39 // pred_check_branch
          %415 = sbr.rel (%p413) target = $region52
        $region51: #{_mroot_gcn_forward_jit.1} parent=39 // pred_region
          %p416 = scmp.lt.s32.totalorder %s26, 1
          %s417 = scalar_select %p416, %s26, 1
          %s418 = smul.addr %s417, 8
          %s419 = scalar_lea.vmem %s2, %s418
        $region52: #{_mroot_gcn_forward_jit.1} parent=39 // pred_fallthru
          _
        // Predicated region
        $region53: #{_mroot_gcn_forward_jit.1} parent=39 // pred_check
          %p420 = pneg %p124
        $region54: #{_mroot_gcn_forward_jit.1} parent=39 // pred_check_branch
          %422 = sbr.rel (%p420) target = $region56
        $region55: #{_mroot_gcn_forward_jit.1} parent=39 // pred_region
          %p423 = scmp.lt.s32.totalorder %s26, 1
          %s424 = scalar_select %p423, %s26, 1
          %s425 = scalar_lea.vmem %s3, %s424
        $region56: #{_mroot_gcn_forward_jit.1} parent=39 // pred_fallthru
          _
        // Predicated region
        $region57: #{_mroot_gcn_forward_jit.1} parent=39 // pred_check
          %p426 = pneg %p192
        $region58: #{_mroot_gcn_forward_jit.1} parent=39 // pred_check_branch
          %428 = sbr.rel (%p426) target = $region60
        $region59: #{_mroot_gcn_forward_jit.1} parent=39 // pred_region
          %p429 = scmp.lt.s32.totalorder %s26, 1
          %s430 = scalar_select %p429, %s26, 1
          %s431 = smul.addr %s430, 2
          %s432 = scalar_lea.vmem %s6, %s431
        $region60: #{_mroot_gcn_forward_jit.1} parent=39 // pred_fallthru
          _
      $region40: #{_mroot_gcn_forward_jit.1} parent=5 // pred_fallthru
        _
      %p433 = scmp.le.s32.totalorder 1, %s26
      %p434 = scmp.lt.s32.totalorder %s26, 3
      %p435 = pnand %p433, %p434
      %p436 = pneg %p435
      // Predicated region
      $region61: #{_mroot_gcn_forward_jit.1} parent=5 // pred_check
        _
      $region62: #{_mroot_gcn_forward_jit.1} parent=5 // pred_check_branch
        %438 = sbr.rel (%p435) target = $region64
      $region63: #{_mroot_gcn_forward_jit.1} parent=5 // pred_region
        %s439 = ssub.s32 %s26, 1
        %p440 = scmp.lt.s32.totalorder %s31, 1
        %s441 = scalar_select %p440, %s31, 1
        %s442 = smul.addr %s441, 2
        %s443 = smul.addr %s442, 8
        %s444 = scalar_lea.vmem %s0, %s443
        %p445 = pneg %p52
        %p446 = pneg %p49
        %p447 = scmp.lt.s32.totalorder %s31, 1
        %s448 = scalar_select %p447, %s31, 1
        %s449 = smul.addr %s448, 2
        %s450 = smul.addr %s449, 8
        %s451 = scalar_lea.vmem %s1, %s450
        %p452 = pneg %p78
        %p453 = pneg %p75
        %p454 = scmp.lt.s32.totalorder %s31, 1
        %s455 = scalar_select %p454, %s31, 1
        %s456 = smul.addr %s455, 8
        %s457 = scalar_lea.vmem %s2, %s456
        %p458 = pneg %p104
        %p459 = pneg %p101
        %p460 = scmp.lt.s32.totalorder %s31, 1
        %s461 = scalar_select %p460, %s31, 1
        %s462 = scalar_lea.vmem %s3, %s461
        %p463 = pneg %p130
        %p464 = pneg %p127
        %p465 = pneg %p151
        %p466 = pneg %p148
        %p467 = pneg %p172
        %p468 = pneg %p169
        %p469 = scmp.lt.s32.totalorder %s31, 1
        %s470 = scalar_select %p469, %s31, 1
        %s471 = smul.addr %s470, 2
        %s472 = scalar_lea.vmem %s6, %s471
        %p473 = pneg %p198
        %p474 = pneg %p195
        %p475 = pneg %p219
        %p476 = pneg %p216
        %p477 = pneg %p240
        %p478 = pneg %p237
        %p479 = pneg %p261
        %p480 = pneg %p258
        %p481 = pneg %p282
        %p482 = pneg %p279
        %p483 = pneg %p308
        %p484 = pneg %p305
        %s485 = sand.u32 %s295, 1
        %s486 = scalar_lea.sflag [#allocation3], %s485
        %s487 = sand.u32 %s295, 1
        %s488 = smul.addr %s487, 48
        %s489 = scalar_lea.vmem [#allocation2], %s488
        %p490 = pneg %p334
        %p491 = pneg %p331
        %s492 = sand.u32 %s31, 1
        %s493 = scalar_lea.sflag [#allocation5], %s492
        %s494 = sand.u32 %s321, 1
        %s495 = smul.addr %s494, 2
        %s496 = scalar_lea.vmem [#allocation4], %s495
        %p497 = pneg %p360
        %p498 = pneg %p357
        %s499 = sand.u32 %s31, 1
        %s500 = scalar_lea.sflag [#allocation5], %s499
        %s501 = sand.u32 %s347, 1
        %s502 = smul.addr %s501, 2
        %s503 = scalar_lea.vmem [#allocation6], %s502
        %p504 = scmp.lt.s32.totalorder %s31, 1
        %s505 = scalar_select %p504, %s31, 1
        %s506 = smul.addr %s505, 2
        %s507 = smul.addr %s506, 8
        %s508 = scalar_lea.vmem %s0, %s507
        %p509 = scmp.lt.s32.totalorder %s31, 1
        %s510 = scalar_select %p509, %s31, 1
        %s511 = smul.addr %s510, 2
        %s512 = smul.addr %s511, 8
        %s513 = scalar_lea.vmem %s1, %s512
        %p514 = scmp.lt.s32.totalorder %s31, 1
        %s515 = scalar_select %p514, %s31, 1
        %s516 = smul.addr %s515, 8
        %s517 = scalar_lea.vmem %s2, %s516
        %p518 = scmp.lt.s32.totalorder %s31, 1
        %s519 = scalar_select %p518, %s31, 1
        %s520 = scalar_lea.vmem %s3, %s519
        %p521 = scmp.lt.s32.totalorder %s31, 1
        %s522 = scalar_select %p521, %s31, 1
        %s523 = smul.addr %s522, 2
        %s524 = scalar_lea.vmem %s6, %s523
        %v525 = vld [vmem:[%s508] sm:$0xff]
        %v526 = vld [vmem:[%s508 + $0x8] sm:$0xff]
        %v527 = vld [vmem:[%s513] sm:$0xff]
        %v528 = vld [vmem:[%s513 + $0x8] sm:$0xff]
        %v529 = vld [vmem:[%s517] sm:$0xff]
        %v530 = vld [vmem:[%s520] sm:$0x1]
        %vm531 = vcmask 130048
        %v533 = vsel %vm531, %v525, 0
        %v536 = vsel %vm531, %v526, 0
        %538 = vmatprep.subr.mxu0 0.0
        %539 = vmatpush1.msra.mxu0 %v527
        %540 = vmatprep.subr.mxu0 0.0
        %541 = vmatpush1.msra.mxu0 %v528
        %542 = vmatprep.subr.mxu0 0.0
        %543 = vmatpush1.msra.mxu0 0.0
        %544 = vmatprep.subr.mxu0 0.0
        %545 = vmatpush1.msra.mxu0 0.0
        %546 = vmatprep.subr.mxu0 0.0
        %547 = vmatpush1.msra.mxu0 0.0
        %548 = vmatprep.subr.mxu0 0.0
        %549 = vmatpush1.msra.mxu0 0.0
        %550 = vmatprep.subr.mxu0 0.0
        %551 = vmatpush1.msra.mxu0 0.0
        %552 = vmatprep.subr.mxu0 0.0
        %553 = vmatpush1.msra.mxu0 0.0
        %554 = vmatprep.subr.mxu0 0.0
        %555 = vmatpush1.msra.mxu0 0.0
        %556 = vmatprep.subr.mxu0 0.0
        %557 = vmatpush1.msra.mxu0 0.0
        %558 = vmatprep.subr.mxu0 0.0
        %559 = vmatpush1.msra.mxu0 0.0
        %560 = vmatprep.subr.mxu0 0.0
        %561 = vmatpush1.msra.mxu0 0.0
        %562 = vmatprep.subr.mxu0 0.0
        %563 = vmatpush1.msra.mxu0 0.0
        %564 = vmatprep.subr.mxu0 0.0
        %565 = vmatpush1.msra.mxu0 0.0
        %566 = vmatprep.subr.mxu0 0.0
        %567 = vmatpush1.msra.mxu0 0.0
        %568 = vmatprep.subr.mxu0 0.0
        %569 = vmatpush1.msra.mxu0 0.0
        %570 = vmatprep.subr.mxu0 0.0
        %571 = vmatpush1.msra.mxu0 0.0
        %572 = vmatprep.subr.mxu0 0.0
        %573 = vmatpush1.msra.mxu0 0.0
        %574 = vmatprep.subr.mxu0 0.0
        %575 = vmatpush1.msra.mxu0 0.0
        %576 = vmatprep.subr.mxu0 0.0
        %577 = vmatpush1.msra.mxu0 0.0
        %578 = vmatprep.subr.mxu0 0.0
        %579 = vmatpush1.msra.mxu0 0.0
        %580 = vmatprep.subr.mxu0 0.0
        %581 = vmatpush1.msra.mxu0 0.0
        %582 = vmatprep.subr.mxu0 0.0
        %583 = vmatpush1.msra.mxu0 0.0
        %584 = vmatprep.subr.mxu0 0.0
        %585 = vmatpush1.msra.mxu0 0.0
        %586 = vmatprep.subr.mxu0 0.0
        %587 = vmatpush1.msra.mxu0 0.0
        %588 = vmatprep.subr.mxu0 0.0
        %589 = vmatpush1.msra.mxu0 0.0
        %590 = vmatprep.subr.mxu0 0.0
        %591 = vmatpush1.msra.mxu0 0.0
        %592 = vmatprep.subr.mxu0 0.0
        %593 = vmatpush1.msra.mxu0 0.0
        %594 = vmatprep.subr.mxu0 0.0
        %595 = vmatpush1.msra.mxu0 0.0
        %596 = vmatprep.subr.mxu0 0.0
        %597 = vmatpush1.msra.mxu0 0.0
        %598 = vmatprep.subr.mxu0 0.0
        %599 = vmatpush1.msra.mxu0 0.0
        %600 = vmatprep.subr.mxu0 0.0
        %601 = vmatpush1.msra.mxu0 0.0
        %602 = vmatprep.mubr.f32.mxu0 0.0
        %603 = vmatmul.mubr.f32.gmra.mrb[0].mxu0 %v533
        %v604 = vpop.f32.mrb[0].mxu0
        %v605 = vadd.f32 0.0, %v604
        %v606 = vpop.f32.mrb[0].mxu0
        %607 = vmatprep.mubr.f32.mxu0 0.0
        %608 = vmatmul.mubr.f32.gmra.mrb[0].mxu0 %v536
        %v609 = vpop.f32.mrb[0].mxu0
        %v610 = vadd.f32 0.0, %v609
        %v611 = vpop.f32.mrb[0].mxu0
        %612 = vdwg.mxu0
        %v614 = vlaneseq
        %v615 = vshrl.u32 %v614, 7
        %v616 = vsub.s32 0, %v615
        %v617 = vrot.slane %v530, %v616
        %vm619 = vcmask 64512
        %v621 = vsel %vm619, %v605, 0
        %v624 = vsel %vm619, %v610, 0
        %626 = vmatprep.subr.mxu0 0.0
        %627 = vmatpush1.msra.mxu0 %v529
        %628 = vmatprep.subr.mxu0 0.0
        %629 = vmatpush1.msra.mxu0 0.0
        %630 = vmatprep.subr.mxu0 0.0
        %631 = vmatpush1.msra.mxu0 0.0
        %632 = vmatprep.subr.mxu0 0.0
        %633 = vmatpush1.msra.mxu0 0.0
        %634 = vmatprep.subr.mxu0 0.0
        %635 = vmatpush1.msra.mxu0 0.0
        %636 = vmatprep.subr.mxu0 0.0
        %637 = vmatpush1.msra.mxu0 0.0
        %638 = vmatprep.subr.mxu0 0.0
        %639 = vmatpush1.msra.mxu0 0.0
        %640 = vmatprep.subr.mxu0 0.0
        %641 = vmatpush1.msra.mxu0 0.0
        %642 = vmatprep.subr.mxu0 0.0
        %643 = vmatpush1.msra.mxu0 0.0
        %644 = vmatprep.subr.mxu0 0.0
        %645 = vmatpush1.msra.mxu0 0.0
        %646 = vmatprep.subr.mxu0 0.0
        %647 = vmatpush1.msra.mxu0 0.0
        %648 = vmatprep.subr.mxu0 0.0
        %649 = vmatpush1.msra.mxu0 0.0
        %650 = vmatprep.subr.mxu0 0.0
        %651 = vmatpush1.msra.mxu0 0.0
        %652 = vmatprep.subr.mxu0 0.0
        %653 = vmatpush1.msra.mxu0 0.0
        %654 = vmatprep.subr.mxu0 0.0
        %655 = vmatpush1.msra.mxu0 0.0
        %656 = vmatprep.subr.mxu0 0.0
        %657 = vmatpush1.msra.mxu0 0.0
        %658 = vmatprep.subr.mxu0 0.0
        %659 = vmatpush1.msra.mxu0 0.0
        %660 = vmatprep.subr.mxu0 0.0
        %661 = vmatpush1.msra.mxu0 0.0
        %662 = vmatprep.subr.mxu0 0.0
        %663 = vmatpush1.msra.mxu0 0.0
        %664 = vmatprep.subr.mxu0 0.0
        %665 = vmatpush1.msra.mxu0 0.0
        %666 = vmatprep.subr.mxu0 0.0
        %667 = vmatpush1.msra.mxu0 0.0
        %668 = vmatprep.subr.mxu0 0.0
        %669 = vmatpush1.msra.mxu0 0.0
        %670 = vmatprep.subr.mxu0 0.0
        %671 = vmatpush1.msra.mxu0 0.0
        %672 = vmatprep.subr.mxu0 0.0
        %673 = vmatpush1.msra.mxu0 0.0
        %674 = vmatprep.subr.mxu0 0.0
        %675 = vmatpush1.msra.mxu0 0.0
        %676 = vmatprep.subr.mxu0 0.0
        %677 = vmatpush1.msra.mxu0 0.0
        %678 = vmatprep.subr.mxu0 0.0
        %679 = vmatpush1.msra.mxu0 0.0
        %680 = vmatprep.subr.mxu0 0.0
        %681 = vmatpush1.msra.mxu0 0.0
        %682 = vmatprep.subr.mxu0 0.0
        %683 = vmatpush1.msra.mxu0 0.0
        %684 = vmatprep.subr.mxu0 0.0
        %685 = vmatpush1.msra.mxu0 0.0
        %686 = vmatprep.subr.mxu0 0.0
        %687 = vmatpush1.msra.mxu0 0.0
        %688 = vmatprep.subr.mxu0 0.0
        %689 = vmatpush1.msra.mxu0 0.0
        %690 = vmatprep.mubr.f32.mxu0 0.0
        %691 = vmatmul.mubr.f32.gmra.mrb[0].mxu0 %v621
        %v692 = vpop.f32.mrb[0].mxu0
        %v693 = vadd.f32 %v617, %v692
        %v694 = vpop.f32.mrb[0].mxu0
        %695 = vmatprep.mubr.f32.mxu0 0.0
        %696 = vmatmul.mubr.f32.gmra.mrb[0].mxu0 %v624
        %v697 = vpop.f32.mrb[0].mxu0
        %v698 = vadd.f32 %v617, %v697
        %v699 = vpop.f32.mrb[0].mxu0
        %700 = vdwg.mxu0
        %v701 = vmax.f32 %v693, 0.0
        %v702 = vmax.f32 %v698, 0.0
        %703 = vst [vmem:[%s489] sm:$0xff] %v701
        %704 = vst [vmem:[%s489 + $0x8] sm:$0xff] %v702
        %v705 = vld [vmem:[%s4] sm:$0xff]
        %v706 = vld [vmem:[%s4 + $0x8] sm:$0xff]
        %v707 = vld [vmem:[%s4 + $0x10] sm:$0xff]
        %v708 = vld [vmem:[%s4 + $0x18] sm:$0xff]
        %v709 = vld [vmem:[%s4 + $0x20] sm:$0xff]
        %v710 = vld [vmem:[%s4 + $0x28] sm:$0xff]
        %v711 = vld [vmem:[%s4 + $0x30] sm:$0xff]
        %v712 = vld [vmem:[%s4 + $0x38] sm:$0xff]
        %v713 = vld [vmem:[%s4 + $0x40] sm:$0xff]
        %v714 = vld [vmem:[%s4 + $0x48] sm:$0xff]
        %v715 = vld [vmem:[%s4 + $0x50] sm:$0xff]
        %v716 = vld [vmem:[%s4 + $0x58] sm:$0xff]
        %v717 = vld [vmem:[%s4 + $0x60] sm:$0xff]
        %v718 = vld [vmem:[%s4 + $0x68] sm:$0xff]
        %v719 = vld [vmem:[%s4 + $0x70] sm:$0xff]
        %v720 = vld [vmem:[%s4 + $0x78] sm:$0xff]
        %721 = vmatprep.subr.mxu0 0.0
        %722 = vmatpush1.msra.mxu0 %v705
        %723 = vmatprep.subr.mxu0 0.0
        %724 = vmatpush1.msra.mxu0 %v706
        %725 = vmatprep.subr.mxu0 0.0
        %726 = vmatpush1.msra.mxu0 %v707
        %727 = vmatprep.subr.mxu0 0.0
        %728 = vmatpush1.msra.mxu0 %v708
        %729 = vmatprep.subr.mxu0 0.0
        %730 = vmatpush1.msra.mxu0 %v709
        %731 = vmatprep.subr.mxu0 0.0
        %732 = vmatpush1.msra.mxu0 %v710
        %733 = vmatprep.subr.mxu0 0.0
        %734 = vmatpush1.msra.mxu0 %v711
        %735 = vmatprep.subr.mxu0 0.0
        %736 = vmatpush1.msra.mxu0 %v712
        %737 = vmatprep.subr.mxu0 0.0
        %738 = vmatpush1.msra.mxu0 %v713
        %739 = vmatprep.subr.mxu0 0.0
        %740 = vmatpush1.msra.mxu0 %v714
        %741 = vmatprep.subr.mxu0 0.0
        %742 = vmatpush1.msra.mxu0 %v715
        %743 = vmatprep.subr.mxu0 0.0
        %744 = vmatpush1.msra.mxu0 %v716
        %745 = vmatprep.subr.mxu0 0.0
        %746 = vmatpush1.msra.mxu0 %v717
        %747 = vmatprep.subr.mxu0 0.0
        %748 = vmatpush1.msra.mxu0 %v718
        %749 = vmatprep.subr.mxu0 0.0
        %750 = vmatpush1.msra.mxu0 %v719
        %751 = vmatprep.subr.mxu0 0.0
        %752 = vmatpush1.msra.mxu0 %v720
        %753 = vmatprep.subr.mxu0 0.0
        %754 = vmatpush1.msra.mxu0 0.0
        %755 = vmatprep.subr.mxu0 0.0
        %756 = vmatpush1.msra.mxu0 0.0
        %757 = vmatprep.subr.mxu0 0.0
        %758 = vmatpush1.msra.mxu0 0.0
        %759 = vmatprep.subr.mxu0 0.0
        %760 = vmatpush1.msra.mxu0 0.0
        %761 = vmatprep.subr.mxu0 0.0
        %762 = vmatpush1.msra.mxu0 0.0
        %763 = vmatprep.subr.mxu0 0.0
        %764 = vmatpush1.msra.mxu0 0.0
        %765 = vmatprep.subr.mxu0 0.0
        %766 = vmatpush1.msra.mxu0 0.0
        %767 = vmatprep.subr.mxu0 0.0
        %768 = vmatpush1.msra.mxu0 0.0
        %769 = vmatprep.subr.mxu0 0.0
        %770 = vmatpush1.msra.mxu0 0.0
        %771 = vmatprep.subr.mxu0 0.0
        %772 = vmatpush1.msra.mxu0 0.0
        %773 = vmatprep.subr.mxu0 0.0
        %774 = vmatpush1.msra.mxu0 0.0
        %775 = vmatprep.subr.mxu0 0.0
        %776 = vmatpush1.msra.mxu0 0.0
        %777 = vmatprep.subr.mxu0 0.0
        %778 = vmatpush1.msra.mxu0 0.0
        %779 = vmatprep.subr.mxu0 0.0
        %780 = vmatpush1.msra.mxu0 0.0
        %781 = vmatprep.subr.mxu0 0.0
        %782 = vmatpush1.msra.mxu0 0.0
        %783 = vmatprep.subr.mxu0 0.0
        %784 = vmatpush1.msra.mxu0 0.0
        %785 = vmatprep.mubr.f32.mxu0 0.0
        %786 = vmatmul.mubr.f32.gmra.mrb[0].mxu0 %v701
        %v787 = vpop.f32.mrb[0].mxu0
        %v788 = vadd.f32 0.0, %v787
        %v789 = vpop.f32.mrb[0].mxu0
        %790 = vmatprep.mubr.f32.mxu0 0.0
        %791 = vmatmul.mubr.f32.gmra.mrb[0].mxu0 %v702
        %v792 = vpop.f32.mrb[0].mxu0
        %v793 = vadd.f32 0.0, %v792
        %v794 = vpop.f32.mrb[0].mxu0
        %795 = vdwg.mxu0
        %v796 = vld [vmem:[%s5] sm:$0x1]
        %v798 = vlaneseq
        %v799 = vshrl.u32 %v798, 7
        %v800 = vsub.s32 0, %v799
        %v801 = vrot.slane %v796, %v800
        %803 = vmatprep.subr.mxu0 0.0
        %804 = vmatpush1.msra.mxu0 %v788
        %805 = vmatprep.subr.mxu0 0.0
        %806 = vmatpush1.msra.mxu0 %v793
        %807 = vmatprep.subr.mxu0 0.0
        %808 = vmatpush1.msra.mxu0 0.0
        %809 = vmatprep.subr.mxu0 0.0
        %810 = vmatpush1.msra.mxu0 0.0
        %811 = vmatprep.subr.mxu0 0.0
        %812 = vmatpush1.msra.mxu0 0.0
        %813 = vmatprep.subr.mxu0 0.0
        %814 = vmatpush1.msra.mxu0 0.0
        %815 = vmatprep.subr.mxu0 0.0
        %816 = vmatpush1.msra.mxu0 0.0
        %817 = vmatprep.subr.mxu0 0.0
        %818 = vmatpush1.msra.mxu0 0.0
        %819 = vmatprep.subr.mxu0 0.0
        %820 = vmatpush1.msra.mxu0 0.0
        %821 = vmatprep.subr.mxu0 0.0
        %822 = vmatpush1.msra.mxu0 0.0
        %823 = vmatprep.subr.mxu0 0.0
        %824 = vmatpush1.msra.mxu0 0.0
        %825 = vmatprep.subr.mxu0 0.0
        %826 = vmatpush1.msra.mxu0 0.0
        %827 = vmatprep.subr.mxu0 0.0
        %828 = vmatpush1.msra.mxu0 0.0
        %829 = vmatprep.subr.mxu0 0.0
        %830 = vmatpush1.msra.mxu0 0.0
        %831 = vmatprep.subr.mxu0 0.0
        %832 = vmatpush1.msra.mxu0 0.0
        %833 = vmatprep.subr.mxu0 0.0
        %834 = vmatpush1.msra.mxu0 0.0
        %835 = vmatprep.subr.mxu0 0.0
        %836 = vmatpush1.msra.mxu0 0.0
        %837 = vmatprep.subr.mxu0 0.0
        %838 = vmatpush1.msra.mxu0 0.0
        %839 = vmatprep.subr.mxu0 0.0
        %840 = vmatpush1.msra.mxu0 0.0
        %841 = vmatprep.subr.mxu0 0.0
        %842 = vmatpush1.msra.mxu0 0.0
        %843 = vmatprep.subr.mxu0 0.0
        %844 = vmatpush1.msra.mxu0 0.0
        %845 = vmatprep.subr.mxu0 0.0
        %846 = vmatpush1.msra.mxu0 0.0
        %847 = vmatprep.subr.mxu0 0.0
        %848 = vmatpush1.msra.mxu0 0.0
        %849 = vmatprep.subr.mxu0 0.0
        %850 = vmatpush1.msra.mxu0 0.0
        %851 = vmatprep.subr.mxu0 0.0
        %852 = vmatpush1.msra.mxu0 0.0
        %853 = vmatprep.subr.mxu0 0.0
        %854 = vmatpush1.msra.mxu0 0.0
        %855 = vmatprep.subr.mxu0 0.0
        %856 = vmatpush1.msra.mxu0 0.0
        %857 = vmatprep.subr.mxu0 0.0
        %858 = vmatpush1.msra.mxu0 0.0
        %859 = vmatprep.subr.mxu0 0.0
        %860 = vmatpush1.msra.mxu0 0.0
        %861 = vmatprep.subr.mxu0 0.0
        %862 = vmatpush1.msra.mxu0 0.0
        %863 = vmatprep.subr.mxu0 0.0
        %864 = vmatpush1.msra.mxu0 0.0
        %865 = vmatprep.subr.mxu0 0.0
        %866 = vmatpush1.msra.mxu0 0.0
        %867 = vmatprep.mubr.f32.mxu0 0.0
        %868 = vmatmul.mubr.f32.gmra.mrb[0].mxu0 %v533
        %v869 = vpop.f32.mrb[0].mxu0
        %v870 = vadd.f32 %v801, %v869
        %v871 = vpop.f32.mrb[0].mxu0
        %872 = vmatprep.mubr.f32.mxu0 0.0
        %873 = vmatmul.mubr.f32.gmra.mrb[0].mxu0 %v536
        %v874 = vpop.f32.mrb[0].mxu0
        %v875 = vadd.f32 %v801, %v874
        %v876 = vpop.f32.mrb[0].mxu0
        %877 = vdwg.mxu0
        %v878 = vmax.f32 %v870, 0.0
        %v879 = vmax.f32 %v875, 0.0
        %s880 = scalar_lea.vmem %s489, 16 [#allocation2]
        %881 = vst [vmem:[%s880] sm:$0xff] %v878
        %882 = vst [vmem:[%s880 + $0x8] sm:$0xff] %v879
        %s883 = scalar_lea.vmem %s4, 128
        %v884 = vld [vmem:[%s883] sm:$0xff]
        %v885 = vld [vmem:[%s883 + $0x8] sm:$0xff]
        %v886 = vld [vmem:[%s883 + $0x10] sm:$0xff]
        %v887 = vld [vmem:[%s883 + $0x18] sm:$0xff]
        %v888 = vld [vmem:[%s883 + $0x20] sm:$0xff]
        %v889 = vld [vmem:[%s883 + $0x28] sm:$0xff]
        %v890 = vld [vmem:[%s883 + $0x30] sm:$0xff]
        %v891 = vld [vmem:[%s883 + $0x38] sm:$0xff]
        %v892 = vld [vmem:[%s883 + $0x40] sm:$0xff]
        %v893 = vld [vmem:[%s883 + $0x48] sm:$0xff]
        %v894 = vld [vmem:[%s883 + $0x50] sm:$0xff]
        %v895 = vld [vmem:[%s883 + $0x58] sm:$0xff]
        %v896 = vld [vmem:[%s883 + $0x60] sm:$0xff]
        %v897 = vld [vmem:[%s883 + $0x68] sm:$0xff]
        %v898 = vld [vmem:[%s883 + $0x70] sm:$0xff]
        %v899 = vld [vmem:[%s883 + $0x78] sm:$0xff]
        %900 = vmatprep.subr.mxu0 0.0
        %901 = vmatpush1.msra.mxu0 %v884
        %902 = vmatprep.subr.mxu0 0.0
        %903 = vmatpush1.msra.mxu0 %v885
        %904 = vmatprep.subr.mxu0 0.0
        %905 = vmatpush1.msra.mxu0 %v886
        %906 = vmatprep.subr.mxu0 0.0
        %907 = vmatpush1.msra.mxu0 %v887
        %908 = vmatprep.subr.mxu0 0.0
        %909 = vmatpush1.msra.mxu0 %v888
        %910 = vmatprep.subr.mxu0 0.0
        %911 = vmatpush1.msra.mxu0 %v889
        %912 = vmatprep.subr.mxu0 0.0
        %913 = vmatpush1.msra.mxu0 %v890
        %914 = vmatprep.subr.mxu0 0.0
        %915 = vmatpush1.msra.mxu0 %v891
        %916 = vmatprep.subr.mxu0 0.0
        %917 = vmatpush1.msra.mxu0 %v892
        %918 = vmatprep.subr.mxu0 0.0
        %919 = vmatpush1.msra.mxu0 %v893
        %920 = vmatprep.subr.mxu0 0.0
        %921 = vmatpush1.msra.mxu0 %v894
        %922 = vmatprep.subr.mxu0 0.0
        %923 = vmatpush1.msra.mxu0 %v895
        %924 = vmatprep.subr.mxu0 0.0
        %925 = vmatpush1.msra.mxu0 %v896
        %926 = vmatprep.subr.mxu0 0.0
        %927 = vmatpush1.msra.mxu0 %v897
        %928 = vmatprep.subr.mxu0 0.0
        %929 = vmatpush1.msra.mxu0 %v898
        %930 = vmatprep.subr.mxu0 0.0
        %931 = vmatpush1.msra.mxu0 %v899
        %932 = vmatprep.subr.mxu0 0.0
        %933 = vmatpush1.msra.mxu0 0.0
        %934 = vmatprep.subr.mxu0 0.0
        %935 = vmatpush1.msra.mxu0 0.0
        %936 = vmatprep.subr.mxu0 0.0
        %937 = vmatpush1.msra.mxu0 0.0
        %938 = vmatprep.subr.mxu0 0.0
        %939 = vmatpush1.msra.mxu0 0.0
        %940 = vmatprep.subr.mxu0 0.0
        %941 = vmatpush1.msra.mxu0 0.0
        %942 = vmatprep.subr.mxu0 0.0
        %943 = vmatpush1.msra.mxu0 0.0
        %944 = vmatprep.subr.mxu0 0.0
        %945 = vmatpush1.msra.mxu0 0.0
        %946 = vmatprep.subr.mxu0 0.0
        %947 = vmatpush1.msra.mxu0 0.0
        %948 = vmatprep.subr.mxu0 0.0
        %949 = vmatpush1.msra.mxu0 0.0
        %950 = vmatprep.subr.mxu0 0.0
        %951 = vmatpush1.msra.mxu0 0.0
        %952 = vmatprep.subr.mxu0 0.0
        %953 = vmatpush1.msra.mxu0 0.0
        %954 = vmatprep.subr.mxu0 0.0
        %955 = vmatpush1.msra.mxu0 0.0
        %956 = vmatprep.subr.mxu0 0.0
        %957 = vmatpush1.msra.mxu0 0.0
        %958 = vmatprep.subr.mxu0 0.0
        %959 = vmatpush1.msra.mxu0 0.0
        %960 = vmatprep.subr.mxu0 0.0
        %961 = vmatpush1.msra.mxu0 0.0
        %962 = vmatprep.subr.mxu0 0.0
        %963 = vmatpush1.msra.mxu0 0.0
        %964 = vmatprep.mubr.f32.mxu0 0.0
        %965 = vmatmul.mubr.f32.gmra.mrb[0].mxu0 %v878
        %v966 = vpop.f32.mrb[0].mxu0
        %v967 = vadd.f32 0.0, %v966
        %v968 = vpop.f32.mrb[0].mxu0
        %969 = vmatprep.mubr.f32.mxu0 0.0
        %970 = vmatmul.mubr.f32.gmra.mrb[0].mxu0 %v879
        %v971 = vpop.f32.mrb[0].mxu0
        %v972 = vadd.f32 0.0, %v971
        %v973 = vpop.f32.mrb[0].mxu0
        %974 = vdwg.mxu0
        %s975 = scalar_lea.vmem %s5, 1
        %v976 = vld [vmem:[%s975] sm:$0x1]
        %v978 = vlaneseq
        %v979 = vshrl.u32 %v978, 7
        %v980 = vsub.s32 0, %v979
        %v981 = vrot.slane %v976, %v980
        %983 = vmatprep.subr.mxu0 0.0
        %984 = vmatpush1.msra.mxu0 %v967
        %985 = vmatprep.subr.mxu0 0.0
        %986 = vmatpush1.msra.mxu0 %v972
        %987 = vmatprep.subr.mxu0 0.0
        %988 = vmatpush1.msra.mxu0 0.0
        %989 = vmatprep.subr.mxu0 0.0
        %990 = vmatpush1.msra.mxu0 0.0
        %991 = vmatprep.subr.mxu0 0.0
        %992 = vmatpush1.msra.mxu0 0.0
        %993 = vmatprep.subr.mxu0 0.0
        %994 = vmatpush1.msra.mxu0 0.0
        %995 = vmatprep.subr.mxu0 0.0
        %996 = vmatpush1.msra.mxu0 0.0
        %997 = vmatprep.subr.mxu0 0.0
        %998 = vmatpush1.msra.mxu0 0.0
        %999 = vmatprep.subr.mxu0 0.0
        %1000 = vmatpush1.msra.mxu0 0.0
        %1001 = vmatprep.subr.mxu0 0.0
        %1002 = vmatpush1.msra.mxu0 0.0
        %1003 = vmatprep.subr.mxu0 0.0
        %1004 = vmatpush1.msra.mxu0 0.0
        %1005 = vmatprep.subr.mxu0 0.0
        %1006 = vmatpush1.msra.mxu0 0.0
        %1007 = vmatprep.subr.mxu0 0.0
        %1008 = vmatpush1.msra.mxu0 0.0
        %1009 = vmatprep.subr.mxu0 0.0
        %1010 = vmatpush1.msra.mxu0 0.0
        %1011 = vmatprep.subr.mxu0 0.0
        %1012 = vmatpush1.msra.mxu0 0.0
        %1013 = vmatprep.subr.mxu0 0.0
        %1014 = vmatpush1.msra.mxu0 0.0
        %1015 = vmatprep.subr.mxu0 0.0
        %1016 = vmatpush1.msra.mxu0 0.0
        %1017 = vmatprep.subr.mxu0 0.0
        %1018 = vmatpush1.msra.mxu0 0.0
        %1019 = vmatprep.subr.mxu0 0.0
        %1020 = vmatpush1.msra.mxu0 0.0
        %1021 = vmatprep.subr.mxu0 0.0
        %1022 = vmatpush1.msra.mxu0 0.0
        %1023 = vmatprep.subr.mxu0 0.0
        %1024 = vmatpush1.msra.mxu0 0.0
        %1025 = vmatprep.subr.mxu0 0.0
        %1026 = vmatpush1.msra.mxu0 0.0
        %1027 = vmatprep.subr.mxu0 0.0
        %1028 = vmatpush1.msra.mxu0 0.0
        %1029 = vmatprep.subr.mxu0 0.0
        %1030 = vmatpush1.msra.mxu0 0.0
        %1031 = vmatprep.subr.mxu0 0.0
        %1032 = vmatpush1.msra.mxu0 0.0
        %1033 = vmatprep.subr.mxu0 0.0
        %1034 = vmatpush1.msra.mxu0 0.0
        %1035 = vmatprep.subr.mxu0 0.0
        %1036 = vmatpush1.msra.mxu0 0.0
        %1037 = vmatprep.subr.mxu0 0.0
        %1038 = vmatpush1.msra.mxu0 0.0
        %1039 = vmatprep.subr.mxu0 0.0
        %1040 = vmatpush1.msra.mxu0 0.0
        %1041 = vmatprep.subr.mxu0 0.0
        %1042 = vmatpush1.msra.mxu0 0.0
        %1043 = vmatprep.subr.mxu0 0.0
        %1044 = vmatpush1.msra.mxu0 0.0
        %1045 = vmatprep.subr.mxu0 0.0
        %1046 = vmatpush1.msra.mxu0 0.0
        %1047 = vmatprep.mubr.f32.mxu0 0.0
        %1048 = vmatmul.mubr.f32.gmra.mrb[0].mxu0 %v533
        %v1049 = vpop.f32.mrb[0].mxu0
        %v1050 = vadd.f32 %v981, %v1049
        %v1051 = vpop.f32.mrb[0].mxu0
        %1052 = vmatprep.mubr.f32.mxu0 0.0
        %1053 = vmatmul.mubr.f32.gmra.mrb[0].mxu0 %v536
        %v1054 = vpop.f32.mrb[0].mxu0
        %v1055 = vadd.f32 %v981, %v1054
        %v1056 = vpop.f32.mrb[0].mxu0
        %1057 = vdwg.mxu0
        %v1058 = vmax.f32 %v1050, 0.0
        %v1059 = vmax.f32 %v1055, 0.0
        %s1060 = scalar_lea.vmem %s489, 32 [#allocation2]
        %1061 = vst [vmem:[%s1060] sm:$0xff] %v1058
        %1062 = vst [vmem:[%s1060 + $0x8] sm:$0xff] %v1059
        %v1063 = vld [vmem:[%s524] sm:$0x3]
        %v1065 = vsel %vm531, %v1063, 0
        %1067 = vmatprep.subr.mxu0 0.0
        %1068 = vmatpush1.msra.mxu0 %v1058
        %1069 = vmatprep.subr.mxu0 0.0
        %1070 = vmatpush1.msra.mxu0 %v1059
        %1071 = vmatprep.subr.mxu0 0.0
        %1072 = vmatpush1.msra.mxu0 0.0
        %1073 = vmatprep.subr.mxu0 0.0
        %1074 = vmatpush1.msra.mxu0 0.0
        %1075 = vmatprep.subr.mxu0 0.0
        %1076 = vmatpush1.msra.mxu0 0.0
        %1077 = vmatprep.subr.mxu0 0.0
        %1078 = vmatpush1.msra.mxu0 0.0
        %1079 = vmatprep.subr.mxu0 0.0
        %1080 = vmatpush1.msra.mxu0 0.0
        %1081 = vmatprep.subr.mxu0 0.0
        %1082 = vmatpush1.msra.mxu0 0.0
        %1083 = vmatprep.subr.mxu0 0.0
        %1084 = vmatpush1.msra.mxu0 0.0
        %1085 = vmatprep.subr.mxu0 0.0
        %1086 = vmatpush1.msra.mxu0 0.0
        %1087 = vmatprep.subr.mxu0 0.0
        %1088 = vmatpush1.msra.mxu0 0.0
        %1089 = vmatprep.subr.mxu0 0.0
        %1090 = vmatpush1.msra.mxu0 0.0
        %1091 = vmatprep.subr.mxu0 0.0
        %1092 = vmatpush1.msra.mxu0 0.0
        %1093 = vmatprep.subr.mxu0 0.0
        %1094 = vmatpush1.msra.mxu0 0.0
        %1095 = vmatprep.subr.mxu0 0.0
        %1096 = vmatpush1.msra.mxu0 0.0
        %1097 = vmatprep.subr.mxu0 0.0
        %1098 = vmatpush1.msra.mxu0 0.0
        %1099 = vmatprep.subr.mxu0 0.0
        %1100 = vmatpush1.msra.mxu0 0.0
        %1101 = vmatprep.subr.mxu0 0.0
        %1102 = vmatpush1.msra.mxu0 0.0
        %1103 = vmatprep.subr.mxu0 0.0
        %1104 = vmatpush1.msra.mxu0 0.0
        %1105 = vmatprep.subr.mxu0 0.0
        %1106 = vmatpush1.msra.mxu0 0.0
        %1107 = vmatprep.subr.mxu0 0.0
        %1108 = vmatpush1.msra.mxu0 0.0
        %1109 = vmatprep.subr.mxu0 0.0
        %1110 = vmatpush1.msra.mxu0 0.0
        %1111 = vmatprep.subr.mxu0 0.0
        %1112 = vmatpush1.msra.mxu0 0.0
        %1113 = vmatprep.subr.mxu0 0.0
        %1114 = vmatpush1.msra.mxu0 0.0
        %1115 = vmatprep.subr.mxu0 0.0
        %1116 = vmatpush1.msra.mxu0 0.0
        %1117 = vmatprep.subr.mxu0 0.0
        %1118 = vmatpush1.msra.mxu0 0.0
        %1119 = vmatprep.subr.mxu0 0.0
        %1120 = vmatpush1.msra.mxu0 0.0
        %1121 = vmatprep.subr.mxu0 0.0
        %1122 = vmatpush1.msra.mxu0 0.0
        %1123 = vmatprep.subr.mxu0 0.0
        %1124 = vmatpush1.msra.mxu0 0.0
        %1125 = vmatprep.subr.mxu0 0.0
        %1126 = vmatpush1.msra.mxu0 0.0
        %1127 = vmatprep.subr.mxu0 0.0
        %1128 = vmatpush1.msra.mxu0 0.0
        %1129 = vmatprep.subr.mxu0 0.0
        %1130 = vmatpush1.msra.mxu0 0.0
        %1131 = vmatprep.mubr.f32.mxu0 0.0
        %1132 = vmatmul.mubr.f32.gmra.mrb[0].mxu0 %v1065
        %v1133 = vpop.f32.mrb[0].mxu0
        %v1134 = vadd.f32 0.0, %v1133
        %v1135 = vpop.f32.mrb[0].mxu0
        %1136 = vdwg.mxu0
        %1137 = vst [vmem:[%s496] sm:$0x3] %v1134
        %v1138 = vld [vmem:[%s7] sm:$0xff]
        %v1139 = vld [vmem:[%s7 + $0x8] sm:$0xff]
        %v1140 = vld [vmem:[%s7 + $0x10] sm:$0xff]
        %v1141 = vld [vmem:[%s7 + $0x18] sm:$0xff]
        %v1142 = vld [vmem:[%s7 + $0x20] sm:$0xff]
        %v1143 = vld [vmem:[%s7 + $0x28] sm:$0xff]
        %v1144 = vld [vmem:[%s7 + $0x30] sm:$0xff]
        %v1145 = vld [vmem:[%s7 + $0x38] sm:$0xff]
        %v1146 = vld [vmem:[%s7 + $0x40] sm:$0xff]
        %v1147 = vld [vmem:[%s7 + $0x48] sm:$0xff]
        %v1148 = vld [vmem:[%s7 + $0x50] sm:$0xff]
        %v1149 = vld [vmem:[%s7 + $0x58] sm:$0xff]
        %v1150 = vld [vmem:[%s7 + $0x60] sm:$0xff]
        %v1151 = vld [vmem:[%s7 + $0x68] sm:$0xff]
        %v1152 = vld [vmem:[%s7 + $0x70] sm:$0xff]
        %v1153 = vld [vmem:[%s7 + $0x78] sm:$0xff]
        %v1154 = vld [vmem:[%s8] sm:$0x1]
        %v1155 = vld [vmem:[%s9] sm:$0xff]
        %v1156 = vld [vmem:[%s9 + $0x8] sm:$0xff]
        %v1157 = vld [vmem:[%s9 + $0x10] sm:$0xff]
        %v1158 = vld [vmem:[%s9 + $0x18] sm:$0xff]
        %v1159 = vld [vmem:[%s9 + $0x20] sm:$0xff]
        %v1160 = vld [vmem:[%s9 + $0x28] sm:$0xff]
        %v1161 = vld [vmem:[%s9 + $0x30] sm:$0xff]
        %v1162 = vld [vmem:[%s9 + $0x38] sm:$0xff]
        %v1163 = vld [vmem:[%s9 + $0x40] sm:$0xff]
        %v1164 = vld [vmem:[%s9 + $0x48] sm:$0xff]
        %v1165 = vld [vmem:[%s9 + $0x50] sm:$0xff]
        %v1166 = vld [vmem:[%s9 + $0x58] sm:$0xff]
        %v1167 = vld [vmem:[%s9 + $0x60] sm:$0xff]
        %v1168 = vld [vmem:[%s9 + $0x68] sm:$0xff]
        %v1169 = vld [vmem:[%s9 + $0x70] sm:$0xff]
        %v1170 = vld [vmem:[%s9 + $0x78] sm:$0xff]
        %v1171 = vld [vmem:[%s10] sm:$0x1]
        %v1173 = vlaneseq
        %v1174 = vshrl.u32 %v1173, 7
        %v1175 = vsub.s32 0, %v1174
        %v1176 = vrot.slane %v1154, %v1175
        %1178 = vmatprep.subr.mxu0 0.0
        %1179 = vmatpush1.msra.mxu0 %v1138
        %1180 = vmatprep.subr.mxu0 0.0
        %1181 = vmatpush1.msra.mxu0 %v1139
        %1182 = vmatprep.subr.mxu0 0.0
        %1183 = vmatpush1.msra.mxu0 %v1140
        %1184 = vmatprep.subr.mxu0 0.0
        %1185 = vmatpush1.msra.mxu0 %v1141
        %1186 = vmatprep.subr.mxu0 0.0
        %1187 = vmatpush1.msra.mxu0 %v1142
        %1188 = vmatprep.subr.mxu0 0.0
        %1189 = vmatpush1.msra.mxu0 %v1143
        %1190 = vmatprep.subr.mxu0 0.0
        %1191 = vmatpush1.msra.mxu0 %v1144
        %1192 = vmatprep.subr.mxu0 0.0
        %1193 = vmatpush1.msra.mxu0 %v1145
        %1194 = vmatprep.subr.mxu0 0.0
        %1195 = vmatpush1.msra.mxu0 %v1146
        %1196 = vmatprep.subr.mxu0 0.0
        %1197 = vmatpush1.msra.mxu0 %v1147
        %1198 = vmatprep.subr.mxu0 0.0
        %1199 = vmatpush1.msra.mxu0 %v1148
        %1200 = vmatprep.subr.mxu0 0.0
        %1201 = vmatpush1.msra.mxu0 %v1149
        %1202 = vmatprep.subr.mxu0 0.0
        %1203 = vmatpush1.msra.mxu0 %v1150
        %1204 = vmatprep.subr.mxu0 0.0
        %1205 = vmatpush1.msra.mxu0 %v1151
        %1206 = vmatprep.subr.mxu0 0.0
        %1207 = vmatpush1.msra.mxu0 %v1152
        %1208 = vmatprep.subr.mxu0 0.0
        %1209 = vmatpush1.msra.mxu0 %v1153
        %1210 = vmatprep.subr.mxu0 0.0
        %1211 = vmatpush1.msra.mxu0 0.0
        %1212 = vmatprep.subr.mxu0 0.0
        %1213 = vmatpush1.msra.mxu0 0.0
        %1214 = vmatprep.subr.mxu0 0.0
        %1215 = vmatpush1.msra.mxu0 0.0
        %1216 = vmatprep.subr.mxu0 0.0
        %1217 = vmatpush1.msra.mxu0 0.0
        %1218 = vmatprep.subr.mxu0 0.0
        %1219 = vmatpush1.msra.mxu0 0.0
        %1220 = vmatprep.subr.mxu0 0.0
        %1221 = vmatpush1.msra.mxu0 0.0
        %1222 = vmatprep.subr.mxu0 0.0
        %1223 = vmatpush1.msra.mxu0 0.0
        %1224 = vmatprep.subr.mxu0 0.0
        %1225 = vmatpush1.msra.mxu0 0.0
        %1226 = vmatprep.subr.mxu0 0.0
        %1227 = vmatpush1.msra.mxu0 0.0
        %1228 = vmatprep.subr.mxu0 0.0
        %1229 = vmatpush1.msra.mxu0 0.0
        %1230 = vmatprep.subr.mxu0 0.0
        %1231 = vmatpush1.msra.mxu0 0.0
        %1232 = vmatprep.subr.mxu0 0.0
        %1233 = vmatpush1.msra.mxu0 0.0
        %1234 = vmatprep.subr.mxu0 0.0
        %1235 = vmatpush1.msra.mxu0 0.0
        %1236 = vmatprep.subr.mxu0 0.0
        %1237 = vmatpush1.msra.mxu0 0.0
        %1238 = vmatprep.subr.mxu0 0.0
        %1239 = vmatpush1.msra.mxu0 0.0
        %1240 = vmatprep.subr.mxu0 0.0
        %1241 = vmatpush1.msra.mxu0 0.0
        %1242 = vmatprep.mubr.f32.mxu0 0.0
        %1243 = vmatmul.mubr.f32.gmra.mrb[0].mxu0 %v1134
        %v1244 = vpop.f32.mrb[0].mxu0
        %v1245 = vadd.f32 %v1176, %v1244
        %v1246 = vpop.f32.mrb[0].mxu0
        %1247 = vdwg.mxu0
        %v1248 = vmax.f32 %v1245, 0.0
        %v1250 = vlaneseq
        %v1251 = vshrl.u32 %v1250, 7
        %v1252 = vsub.s32 0, %v1251
        %v1253 = vrot.slane %v1171, %v1252
        %1255 = vmatprep.subr.mxu0 0.0
        %1256 = vmatpush1.msra.mxu0 %v1155
        %1257 = vmatprep.subr.mxu0 0.0
        %1258 = vmatpush1.msra.mxu0 %v1156
        %1259 = vmatprep.subr.mxu0 0.0
        %1260 = vmatpush1.msra.mxu0 %v1157
        %1261 = vmatprep.subr.mxu0 0.0
        %1262 = vmatpush1.msra.mxu0 %v1158
        %1263 = vmatprep.subr.mxu0 0.0
        %1264 = vmatpush1.msra.mxu0 %v1159
        %1265 = vmatprep.subr.mxu0 0.0
        %1266 = vmatpush1.msra.mxu0 %v1160
        %1267 = vmatprep.subr.mxu0 0.0
        %1268 = vmatpush1.msra.mxu0 %v1161
        %1269 = vmatprep.subr.mxu0 0.0
        %1270 = vmatpush1.msra.mxu0 %v1162
        %1271 = vmatprep.subr.mxu0 0.0
        %1272 = vmatpush1.msra.mxu0 %v1163
        %1273 = vmatprep.subr.mxu0 0.0
        %1274 = vmatpush1.msra.mxu0 %v1164
        %1275 = vmatprep.subr.mxu0 0.0
        %1276 = vmatpush1.msra.mxu0 %v1165
        %1277 = vmatprep.subr.mxu0 0.0
        %1278 = vmatpush1.msra.mxu0 %v1166
        %1279 = vmatprep.subr.mxu0 0.0
        %1280 = vmatpush1.msra.mxu0 %v1167
        %1281 = vmatprep.subr.mxu0 0.0
        %1282 = vmatpush1.msra.mxu0 %v1168
        %1283 = vmatprep.subr.mxu0 0.0
        %1284 = vmatpush1.msra.mxu0 %v1169
        %1285 = vmatprep.subr.mxu0 0.0
        %1286 = vmatpush1.msra.mxu0 %v1170
        %1287 = vmatprep.subr.mxu0 0.0
        %1288 = vmatpush1.msra.mxu0 0.0
        %1289 = vmatprep.subr.mxu0 0.0
        %1290 = vmatpush1.msra.mxu0 0.0
        %1291 = vmatprep.subr.mxu0 0.0
        %1292 = vmatpush1.msra.mxu0 0.0
        %1293 = vmatprep.subr.mxu0 0.0
        %1294 = vmatpush1.msra.mxu0 0.0
        %1295 = vmatprep.subr.mxu0 0.0
        %1296 = vmatpush1.msra.mxu0 0.0
        %1297 = vmatprep.subr.mxu0 0.0
        %1298 = vmatpush1.msra.mxu0 0.0
        %1299 = vmatprep.subr.mxu0 0.0
        %1300 = vmatpush1.msra.mxu0 0.0
        %1301 = vmatprep.subr.mxu0 0.0
        %1302 = vmatpush1.msra.mxu0 0.0
        %1303 = vmatprep.subr.mxu0 0.0
        %1304 = vmatpush1.msra.mxu0 0.0
        %1305 = vmatprep.subr.mxu0 0.0
        %1306 = vmatpush1.msra.mxu0 0.0
        %1307 = vmatprep.subr.mxu0 0.0
        %1308 = vmatpush1.msra.mxu0 0.0
        %1309 = vmatprep.subr.mxu0 0.0
        %1310 = vmatpush1.msra.mxu0 0.0
        %1311 = vmatprep.subr.mxu0 0.0
        %1312 = vmatpush1.msra.mxu0 0.0
        %1313 = vmatprep.subr.mxu0 0.0
        %1314 = vmatpush1.msra.mxu0 0.0
        %1315 = vmatprep.subr.mxu0 0.0
        %1316 = vmatpush1.msra.mxu0 0.0
        %1317 = vmatprep.subr.mxu0 0.0
        %1318 = vmatpush1.msra.mxu0 0.0
        %1319 = vmatprep.mubr.f32.mxu0 0.0
        %1320 = vmatmul.mubr.f32.gmra.mrb[0].mxu0 %v1248
        %v1321 = vpop.f32.mrb[0].mxu0
        %v1322 = vadd.f32 %v1253, %v1321
        %v1323 = vpop.f32.mrb[0].mxu0
        %1324 = vdwg.mxu0
        %1325 = vst [vmem:[%s503] sm:$0x3] %v1322
        %s1326 = sand.u32 %s295, 1
        %s1327 = scalar_lea.sflag [#allocation3], %s1326
        %s1328 = sand.u32 %s295, 1
        %s1329 = smul.addr %s1328, 48
        %s1330 = scalar_lea.vmem [#allocation2], %s1329
        %s1331 = sand.u32 %s31, 1
        %s1332 = scalar_lea.sflag [#allocation5], %s1331
        %s1333 = sand.u32 %s321, 1
        %s1334 = smul.addr %s1333, 2
        %s1335 = scalar_lea.vmem [#allocation4], %s1334
        %s1336 = sand.u32 %s31, 1
        %s1337 = scalar_lea.sflag [#allocation5], %s1336
        %s1338 = sand.u32 %s347, 1
        %s1339 = smul.addr %s1338, 2
        %s1340 = scalar_lea.vmem [#allocation6], %s1339
        // Predicated region
        $region65: #{_mroot_gcn_forward_jit.1} parent=63 // pred_check
          %p1341 = pneg %p305
        $region66: #{_mroot_gcn_forward_jit.1} parent=63 // pred_check_branch
          %1343 = sbr.rel (%p1341) target = $region68
        $region67: #{_mroot_gcn_forward_jit.1} parent=63 // pred_region
          %s1345 = ssub.s32 768, 768
          %1346 = vsyncadd %s1327, %s1345
          %s1347 = smul.addr %s31, 6
          %s1348 = smul.addr %s1347, 128
          %s1349 = scalar_lea.hbm %s11, %s1348
          %s1350 = sshll.u32 %s1330, 4
          %s1351 = int_to_ptr.vmem [resolvable:$true] %s1350
          %1356 = dma.vmem_to_hbm [thread:$0]  %s1351, 768, %s1349, %s1327, 128, 128, 8
        $region68: #{_mroot_gcn_forward_jit.1} parent=63 // pred_fallthru
          _
        // Predicated region
        $region69: #{_mroot_gcn_forward_jit.1} parent=63 // pred_check
          %p1357 = pneg %p331
        $region70: #{_mroot_gcn_forward_jit.1} parent=63 // pred_check_branch
          %1359 = sbr.rel (%p1357) target = $region72
        $region71: #{_mroot_gcn_forward_jit.1} parent=63 // pred_region
          %s1361 = ssub.s32 32, 32
          %1362 = vsyncadd %s1332, %s1361
          %s1363 = smul.addr %s31, 32
          %s1364 = scalar_lea.hbm %s12, %s1363
          %s1366 = sshll.u32 %s1335, 4
          %s1367 = int_to_ptr.vmem [resolvable:$true] %s1366
          %1369 = dma.vmem_to_hbm [thread:$0]  %s1367, 32, %s1364, %s1332
        $region72: #{_mroot_gcn_forward_jit.1} parent=63 // pred_fallthru
          _
        // Predicated region
        $region73: #{_mroot_gcn_forward_jit.1} parent=63 // pred_check
          %p1370 = pneg %p357
        $region74: #{_mroot_gcn_forward_jit.1} parent=63 // pred_check_branch
          %1372 = sbr.rel (%p1370) target = $region76
        $region75: #{_mroot_gcn_forward_jit.1} parent=63 // pred_region
          %s1374 = ssub.s32 32, 32
          %1375 = vsyncadd %s1337, %s1374
          %s1376 = smul.addr %s31, 32
          %s1377 = scalar_lea.hbm %s13, %s1376
          %s1379 = sshll.u32 %s1340, 4
          %s1380 = int_to_ptr.vmem [resolvable:$true] %s1379
          %1382 = dma.vmem_to_hbm [thread:$0]  %s1380, 32, %s1377, %s1337
        $region76: #{_mroot_gcn_forward_jit.1} parent=63 // pred_fallthru
          _
      $region64: #{_mroot_gcn_forward_jit.1} parent=5 // pred_fallthru
        _
      %p1383 = scmp.le.s32.totalorder 2, %s26
      // Predicated region
      $region77: #{_mroot_gcn_forward_jit.1} parent=5 // pred_check
        %p1384 = pneg %p1383
      $region78: #{_mroot_gcn_forward_jit.1} parent=5 // pred_check_branch
        %1386 = sbr.rel (%p1384) target = $region80
      $region79: #{_mroot_gcn_forward_jit.1} parent=5 // pred_region
        %s1387 = ssub.s32 %s26, 2
        // Predicated region
        $region81: #{_mroot_gcn_forward_jit.1} parent=79 // pred_check
          %p1388 = pneg %p311
        $region82: #{_mroot_gcn_forward_jit.1} parent=79 // pred_check_branch
          %1390 = sbr.rel (%p1388) target = $region84
        $region83: #{_mroot_gcn_forward_jit.1} parent=79 // pred_region
          %s1391 = sand.u32 %s296, 1
          %s1392 = scalar_lea.sflag [#allocation3], %s1391
          %s1393 = sand.u32 %s296, 1
          %s1394 = smul.addr %s1393, 48
          %s1395 = scalar_lea.vmem [#allocation2], %s1394
          %1396 = dma.done %s1392, 768
        $region84: #{_mroot_gcn_forward_jit.1} parent=79 // pred_fallthru
          _
        // Predicated region
        $region85: #{_mroot_gcn_forward_jit.1} parent=79 // pred_check
          %p1397 = pneg %p337
        $region86: #{_mroot_gcn_forward_jit.1} parent=79 // pred_check_branch
          %1399 = sbr.rel (%p1397) target = $region88
        $region87: #{_mroot_gcn_forward_jit.1} parent=79 // pred_region
          %s1400 = sand.u32 %s32, 1
          %s1401 = scalar_lea.sflag [#allocation5], %s1400
          %s1402 = sand.u32 %s322, 1
          %s1403 = smul.addr %s1402, 2
          %s1404 = scalar_lea.vmem [#allocation4], %s1403
          %1405 = dma.done %s1401, 32
        $region88: #{_mroot_gcn_forward_jit.1} parent=79 // pred_fallthru
          _
        // Predicated region
        $region89: #{_mroot_gcn_forward_jit.1} parent=79 // pred_check
          %p1406 = pneg %p363
        $region90: #{_mroot_gcn_forward_jit.1} parent=79 // pred_check_branch
          %1408 = sbr.rel (%p1406) target = $region92
        $region91: #{_mroot_gcn_forward_jit.1} parent=79 // pred_region
          %s1409 = sand.u32 %s32, 1
          %s1410 = scalar_lea.sflag [#allocation5], %s1409
          %s1411 = sand.u32 %s348, 1
          %s1412 = smul.addr %s1411, 2
          %s1413 = scalar_lea.vmem [#allocation6], %s1412
          %1414 = dma.done %s1410, 32
        $region92: #{_mroot_gcn_forward_jit.1} parent=79 // pred_fallthru
          _
      $region80: #{_mroot_gcn_forward_jit.1} parent=5 // pred_fallthru
        _
    $region6: #{_mroot_gcn_forward_jit.1} parent=1 // loop_footer
      %s30 = sadd.s32 1, %s26
    $region7: #{_mroot_gcn_forward_jit.1} parent=1 // loop_footer_branch
      %25 = sbr.rel target = $region3
    $region8: #{_mroot_gcn_forward_jit.1} parent=1 // loop_exit
      _
    %1415 = vsyncpa [#allocation3], 1
    %s1416 = scalar_lea.sflag [#allocation3], 1
    %1417 = vsyncpa %s1416, 1
    %1418 = vsyncpa [#allocation5], 1
    %s1419 = scalar_lea.sflag [#allocation5], 1
    %1420 = vsyncpa %s1419, 1

</llo_original>
